<compile_context>
chip_gen: v5e
topology: v5e:2x2
jax: 0.10.0
libtpu: 0.0.40
codegen_flags: <defaults>
</compile_context>

<pallas_src>
import jax
import jax.numpy as jnp
from jax.experimental import pallas as pl
from jax.experimental.pallas import tpu as pltpu


def _round_up(v, m):
    return ((v + m - 1) // m) * m


def _pick_time_chunk(T, TB, GP, budget_bytes=8 << 20):
    """Largest divisor of T whose double-buffered gate block fits the budget."""
    cap = max(1, budget_bytes // (2 * TB * GP * 4))
    tt = min(T, cap)
    while T % tt:
        tt -= 1
    return tt


def _gru_kernel(gx_ref, whh_ref, bhn_ref, wln_ref, bln_ref, o_ref, h_ref):
    # gx_ref: (TT, TB, GP) precomputed input gates (time-major, lane-padded)
    # whh_ref: (HP, GP), bhn_ref: (1, HP), wln_ref: (HP, OW), bln_ref: (1, OW)
    # h_ref:  (TB, HP) VMEM scratch carrying the hidden state across time chunks
    TT, TB, GP = gx_ref.shape
    HP = whh_ref.shape[0]
    t = pl.program_id(1)

    @pl.when(t == 0)
    def _():
        h_ref[...] = jnp.zeros_like(h_ref)

    # Loop-invariant loads / broadcasts hoisted out of the recurrence.
    whh = whh_ref[...]                                   # (HP, GP)
    bhn = jnp.broadcast_to(bhn_ref[...], (TB, HP))       # (TB, HP), broadcast once

    def step(s, h):
        gx = gx_ref[s]                                   # (TB, GP): leading-axis index
        gh = jnp.dot(h, whh, preferred_element_type=jnp.float32)
        # 128-lane-aligned gate slices -> free vreg-block selects.
        r = jax.nn.sigmoid(gx[:, :HP] + gh[:, :HP])
        z = jax.nn.sigmoid(gx[:, HP:2 * HP] + gh[:, HP:2 * HP])
        n = jnp.tanh(gx[:, 2 * HP:] + r * (gh[:, 2 * HP:] + bhn))
        return (1.0 - z) * n + z * h

    unroll = TT if TT <= 32 else 8   # steps are data-dependent; cap code-size blowup
    h = jax.lax.fori_loop(0, TT, step, h_ref[...], unroll=unroll)
    h_ref[...] = h

    @pl.when(t == pl.num_programs(1) - 1)
    def _():
        # Linear(H, 1) + LeakyReLU(0.01) applied to h_T (lane-padded head).
        y = jnp.dot(h, wln_ref[...], preferred_element_type=jnp.float32) + bln_ref[...]
        o_ref[...] = jnp.where(y >= 0.0, y, 0.01 * y).astype(o_ref.dtype)


def test_forward(x, params, *, batch_tile=None, time_chunk=None):
    """Fused forward pass. x: (B, T, F) float32. Returns (B, 1) float32."""
    w_ih, w_hh, b_ih, b_hh, w_ln, b_ln = params
    B, T, F = x.shape
    H = w_hh.shape[0]
    HP = _round_up(H, 128)          # per-gate lane padding
    GP = 3 * HP
    OW = 128                        # lane-dense output slab width

    # ---- batch tile: multiple of 8; >= 2 grid steps whenever B >= 16 (v7x) ----
    if batch_tile is None:
        TB = 8 if B <= 8 else min(128, _round_up((B + 1) // 2, 8))
    else:
        TB = batch_tile
    assert TB % 8 == 0, "batch tile must be a multiple of 8"
    Bp = _round_up(max(B, TB), TB)

    # ---- fold the r/z halves of b_hh into the input-gate bias ----
    b_fold = b_ih + jnp.concatenate(
        [b_hh[:, :2 * H], jnp.zeros((1, H), b_hh.dtype)], axis=1)

    # ---- input projection hoisted to XLA (kernel only runs the recurrence) ----
    gx = jnp.einsum('btf,fg->btg', x, w_ih) + b_fold          # (B, T, 3H)
    gx = gx.reshape(B, T, 3, H)
    gx = jnp.pad(gx, ((0, Bp - B), (0, 0), (0, 0), (0, HP - H)))
    gx = gx.reshape(Bp, T, GP).transpose(1, 0, 2)             # (T, Bp, GP) time-major

    # ---- per-gate lane-padded recurrent weights / head weights ----
    whh_p = jnp.zeros((HP, GP), jnp.float32)
    for g in range(3):
        whh_p = whh_p.at[:H, g * HP:g * HP + H].set(w_hh[:, g * H:(g + 1) * H])
    bhn_p = jnp.zeros((1, HP), jnp.float32).at[0, :H].set(b_hh[0, 2 * H:])
    wln_p = jnp.zeros((HP, OW), jnp.float32).at[:H, 0].set(w_ln[:, 0])
    bln_p = jnp.zeros((1, OW), jnp.float32).at[0, 0].set(b_ln[0, 0])

    # ---- time chunk: bounds VMEM independent of T ----
    TT = _pick_time_chunk(T, TB, GP) if time_chunk is None else time_chunk
    assert T % TT == 0, "sequence length must be a multiple of the time chunk"
    grid = (Bp // TB, T // TT)

    cost = pl.CostEstimate(
        flops=2 * Bp * T * HP * GP + 2 * Bp * HP * OW,
        transcendentals=Bp * T * 3 * HP,
        bytes_accessed=4 * (gx.size + whh_p.size + bhn_p.size
                            + wln_p.size + bln_p.size + Bp * OW),
    )

    out = pl.pallas_call(
        _gru_kernel,
        out_shape=jax.ShapeDtypeStruct((Bp, OW), jnp.float32),
        grid_spec=pltpu.PrefetchScalarGridSpec(
            num_scalar_prefetch=0,
            grid=grid,
            in_specs=[
                pl.BlockSpec((TT, TB, GP), lambda i, t: (t, i, 0)),  # gates (pipelined)
                pl.BlockSpec((HP, GP), lambda i, t: (0, 0)),         # W_hh (VMEM-resident)
                pl.BlockSpec((1, HP), lambda i, t: (0, 0)),          # b_hh[n]
                pl.BlockSpec((HP, OW), lambda i, t: (0, 0)),         # W_ln (lane-padded)
                pl.BlockSpec((1, OW), lambda i, t: (0, 0)),          # b_ln (lane-padded)
            ],
            out_specs=pl.BlockSpec((TB, OW), lambda i, t: (i, 0)),
            scratch_shapes=[pltpu.VMEM((TB, HP), jnp.float32)],      # hidden-state carry
        ),
        compiler_params=pltpu.CompilerParams(
            dimension_semantics=("parallel", "arbitrary"),
            vmem_limit_bytes=32 * 1024 * 1024,   # safe on v7x; v5e/v6e have headroom
        ),
        cost_estimate=cost,
    )(gx, whh_p, bhn_p, wln_p, bln_p)

    return out[:B, :1]


def init_params(key, f_in, n_hidden):
    """Deterministic init mimicking PyTorch GRU/Linear U(-1/sqrt(H), 1/sqrt(H))."""
    H = n_hidden
    ks = jax.random.split(key, 6)
    bound = 1.0 / (H ** 0.5)
    # GRU weights stored pre-transposed to (in, 3H); gate order [r | z | n].
    w_ih = jax.random.uniform(ks[0], (f_in, 3 * H), jnp.float32, -bound, bound)
    w_hh = jax.random.uniform(ks[1], (H, 3 * H), jnp.float32, -bound, bound)
    b_ih = jax.random.uniform(ks[2], (1, 3 * H), jnp.float32, -bound, bound)
    b_hh = jax.random.uniform(ks[3], (1, 3 * H), jnp.float32, -bound, bound)
    # Linear(H, 1), stored (H, 1)
    w_ln = jax.random.uniform(ks[4], (H, 1), jnp.float32, -bound, bound)
    b_ln = jax.random.uniform(ks[5], (1, 1), jnp.float32, -bound, bound)
    return (w_ih, w_hh, b_ih, b_hh, w_ln, b_ln)


def reference_forward(x, params):
    """Pure-JAX reference of Test.forward for correctness checking."""
    w_ih, w_hh, b_ih, b_hh, w_ln, b_ln = params
    B, T, F = x.shape
    H = w_hh.shape[0]

    def step(h, x_t):
        gi = x_t @ w_ih + b_ih[0]
        gh = h @ w_hh + b_hh[0]
        r = jax.nn.sigmoid(gi[:, :H] + gh[:, :H])
        z = jax.nn.sigmoid(gi[:, H:2 * H] + gh[:, H:2 * H])
        n = jnp.tanh(gi[:, 2 * H:] + r * gh[:, 2 * H:])
        return (1.0 - z) * n + z * h, None

    h0 = jnp.zeros((B, H), jnp.float32)
    h_last, _ = jax.lax.scan(step, h0, jnp.transpose(x, (1, 0, 2)))
    y = h_last @ w_ln + b_ln
    return jnp.where(y >= 0.0, y, 0.01 * y)


if __name__ == "__main__":
    key = jax.random.PRNGKey(0)
    k_x, k_p = jax.random.split(key)

    B, T, F, H = 8, 8, 16, 32            # batch, seq, features, n_hidden
    x = jax.random.normal(k_x, (B, T, F), jnp.float32)
    params = init_params(k_p, F, H)

    out = test_forward(x, params)
    out = jax.block_until_ready(out)

    assert out.shape == (B, 1)
    assert bool(jnp.all(jnp.isfinite(out)))

    ref = reference_forward(x, params)
    assert bool(jnp.allclose(out, ref, atol=1e-3, rtol=1e-3))

    print("KERNEL_OK")
</pallas_src>

<mosaic_0001>
module attributes {stable_mosaic.version = 11 : i64} {
  func.func @_gru_kernel(%arg0: i32, %arg1: i32, %arg2: memref<8x8x384xf32, #tpu.memory_space<vmem>>, %arg3: memref<128x384xf32, #tpu.memory_space<vmem>>, %arg4: memref<1x128xf32, #tpu.memory_space<vmem>>, %arg5: memref<128x128xf32, #tpu.memory_space<vmem>>, %arg6: memref<1x128xf32, #tpu.memory_space<vmem>>, %arg7: memref<8x128xf32, #tpu.memory_space<vmem>>, %arg8: memref<8x128xf32, #tpu.memory_space<vmem>>) attributes {dimension_semantics = [#tpu.dimension_semantics<parallel>, #tpu.dimension_semantics<arbitrary>], iteration_bounds = array<i64: 1, 1>, scalar_prefetch = 0 : i64, scratch_operands = 1 : i64, tpu.core_type = #tpu.core_type<tc>, window_params = [{transform_indices = @transform_0, window_bounds = array<i64: 8, 8, 384>}, {pipeline_mode = #tpu.pipeline_mode<synchronous>, transform_indices = @transform_1, window_bounds = array<i64: 128, 384>}, {pipeline_mode = #tpu.pipeline_mode<synchronous>, transform_indices = @transform_2, window_bounds = array<i64: 1, 128>}, {pipeline_mode = #tpu.pipeline_mode<synchronous>, transform_indices = @transform_3, window_bounds = array<i64: 128, 128>}, {pipeline_mode = #tpu.pipeline_mode<synchronous>, transform_indices = @transform_4, window_bounds = array<i64: 1, 128>}, {transform_indices = @transform_5, window_bounds = array<i64: 8, 128>}]} {
    %c0_i32 = arith.constant 0 : i32
    %0 = arith.cmpi eq, %arg1, %c0_i32 : i32
    %1 = arith.extui %0 : i1 to i32
    %c0_i32_0 = arith.constant 0 : i32
    %2 = arith.cmpi ne, %1, %c0_i32_0 : i32
    scf.if %2 {
      %cst_58 = arith.constant 0.000000e+00 : f32
      %260 = vector.broadcast %cst_58 : f32 to vector<8x128xf32>
      %c0_59 = arith.constant 0 : index
      %c0_60 = arith.constant 0 : index
      %261 = vector.load %arg8[%c0_59, %c0_60] : memref<8x128xf32, #tpu.memory_space<vmem>>, vector<8x128xf32>
      tpu.vector_store %arg8[%c0_59, %c0_60], %260 {strides = array<i32>} : memref<8x128xf32, #tpu.memory_space<vmem>>, vector<8x128xf32>,
    } else {
    }
    %c0 = arith.constant 0 : index
    %c0_1 = arith.constant 0 : index
    %3 = vector.load %arg3[%c0, %c0_1] : memref<128x384xf32, #tpu.memory_space<vmem>>, vector<128x384xf32>
    %c0_2 = arith.constant 0 : index
    %c0_3 = arith.constant 0 : index
    %4 = vector.load %arg4[%c0_2, %c0_3] : memref<1x128xf32, #tpu.memory_space<vmem>>, vector<1x128xf32>
    %5 = vector.shape_cast %4 : vector<1x128xf32> to vector<1x128xf32>
    %6 = vector.broadcast %5 : vector<1x128xf32> to vector<8x128xf32>
    %c0_4 = arith.constant 0 : index
    %c0_5 = arith.constant 0 : index
    %7 = vector.load %arg8[%c0_4, %c0_5] : memref<8x128xf32, #tpu.memory_space<vmem>>, vector<8x128xf32>
    %c0_i32_6 = arith.constant 0 : i32
    %8 = arith.index_cast %c0_i32_6 : i32 to index
    %c0_7 = arith.constant 0 : index
    %c0_8 = arith.constant 0 : index
    %9 = vector.load %arg2[%8, %c0_7, %c0_8] : memref<8x8x384xf32, #tpu.memory_space<vmem>>, vector<1x8x384xf32>
    %10 = vector.shape_cast %9 : vector<1x8x384xf32> to vector<8x384xf32>
    %cst = arith.constant dense<0.000000e+00> : vector<8x384xf32>
    %11 = tpu.matmul %7, %3, %cst {dimension_numbers = #tpu.dot_dimension_numbers<[1], [0], [0], [1], [0, 0, 1, 1], [], []>} : vector<8x128xf32>, vector<128x384xf32>, vector<8x384xf32> -> vector<8x384xf32>
    %12 = vector.extract_strided_slice %10 {offsets = [0, 0], sizes = [8, 128], strides = [1, 1]} : vector<8x384xf32> to vector<8x128xf32>
    %13 = vector.extract_strided_slice %11 {offsets = [0, 0], sizes = [8, 128], strides = [1, 1]} : vector<8x384xf32> to vector<8x128xf32>
    %14 = arith.addf %12, %13 : vector<8x128xf32>
    %15 = arith.negf %14 : vector<8x128xf32>
    %16 = math.exp %15 : vector<8x128xf32>
    %cst_9 = arith.constant 1.000000e+00 : f32
    %17 = vector.broadcast %cst_9 : f32 to vector<8x128xf32>
    %18 = arith.addf %17, %16 : vector<8x128xf32>
    %19 = arith.divf %17, %18 : vector<8x128xf32>
    %20 = vector.extract_strided_slice %10 {offsets = [0, 128], sizes = [8, 128], strides = [1, 1]} : vector<8x384xf32> to vector<8x128xf32>
    %21 = vector.extract_strided_slice %11 {offsets = [0, 128], sizes = [8, 128], strides = [1, 1]} : vector<8x384xf32> to vector<8x128xf32>
    %22 = arith.addf %20, %21 : vector<8x128xf32>
    %23 = arith.negf %22 : vector<8x128xf32>
    %24 = math.exp %23 : vector<8x128xf32>
    %cst_10 = arith.constant 1.000000e+00 : f32
    %25 = vector.broadcast %cst_10 : f32 to vector<8x128xf32>
    %26 = arith.addf %25, %24 : vector<8x128xf32>
    %27 = arith.divf %25, %26 : vector<8x128xf32>
    %28 = vector.extract_strided_slice %10 {offsets = [0, 256], sizes = [8, 128], strides = [1, 1]} : vector<8x384xf32> to vector<8x128xf32>
    %29 = vector.extract_strided_slice %11 {offsets = [0, 256], sizes = [8, 128], strides = [1, 1]} : vector<8x384xf32> to vector<8x128xf32>
    %30 = arith.addf %29, %6 : vector<8x128xf32>
    %31 = arith.mulf %19, %30 : vector<8x128xf32>
    %32 = arith.addf %28, %31 : vector<8x128xf32>
    %33 = math.tanh %32 : vector<8x128xf32>
    %cst_11 = arith.constant 1.000000e+00 : f32
    %34 = vector.broadcast %cst_11 : f32 to vector<8x128xf32>
    %35 = arith.subf %34, %27 : vector<8x128xf32>
    %36 = arith.mulf %35, %33 : vector<8x128xf32>
    %37 = arith.mulf %27, %7 : vector<8x128xf32>
    %38 = arith.addf %36, %37 : vector<8x128xf32>
    %c1_i32 = arith.constant 1 : i32
    %39 = arith.index_cast %c1_i32 : i32 to index
    %c0_12 = arith.constant 0 : index
    %c0_13 = arith.constant 0 : index
    %40 = vector.load %arg2[%39, %c0_12, %c0_13] : memref<8x8x384xf32, #tpu.memory_space<vmem>>, vector<1x8x384xf32>
    %41 = vector.shape_cast %40 : vector<1x8x384xf32> to vector<8x384xf32>
    %cst_14 = arith.constant dense<0.000000e+00> : vector<8x384xf32>
    %42 = tpu.matmul %38, %3, %cst_14 {dimension_numbers = #tpu.dot_dimension_numbers<[1], [0], [0], [1], [0, 0, 1, 1], [], []>} : vector<8x128xf32>, vector<128x384xf32>, vector<8x384xf32> -> vector<8x384xf32>
    %43 = vector.extract_strided_slice %41 {offsets = [0, 0], sizes = [8, 128], strides = [1, 1]} : vector<8x384xf32> to vector<8x128xf32>
    %44 = vector.extract_strided_slice %42 {offsets = [0, 0], sizes = [8, 128], strides = [1, 1]} : vector<8x384xf32> to vector<8x128xf32>
    %45 = arith.addf %43, %44 : vector<8x128xf32>
    %46 = arith.negf %45 : vector<8x128xf32>
    %47 = math.exp %46 : vector<8x128xf32>
    %cst_15 = arith.constant 1.000000e+00 : f32
    %48 = vector.broadcast %cst_15 : f32 to vector<8x128xf32>
    %49 = arith.addf %48, %47 : vector<8x128xf32>
    %50 = arith.divf %48, %49 : vector<8x128xf32>
    %51 = vector.extract_strided_slice %41 {offsets = [0, 128], sizes = [8, 128], strides = [1, 1]} : vector<8x384xf32> to vector<8x128xf32>
    %52 = vector.extract_strided_slice %42 {offsets = [0, 128], sizes = [8, 128], strides = [1, 1]} : vector<8x384xf32> to vector<8x128xf32>
    %53 = arith.addf %51, %52 : vector<8x128xf32>
    %54 = arith.negf %53 : vector<8x128xf32>
    %55 = math.exp %54 : vector<8x128xf32>
    %cst_16 = arith.constant 1.000000e+00 : f32
    %56 = vector.broadcast %cst_16 : f32 to vector<8x128xf32>
    %57 = arith.addf %56, %55 : vector<8x128xf32>
    %58 = arith.divf %56, %57 : vector<8x128xf32>
    %59 = vector.extract_strided_slice %41 {offsets = [0, 256], sizes = [8, 128], strides = [1, 1]} : vector<8x384xf32> to vector<8x128xf32>
    %60 = vector.extract_strided_slice %42 {offsets = [0, 256], sizes = [8, 128], strides = [1, 1]} : vector<8x384xf32> to vector<8x128xf32>
    %61 = arith.addf %60, %6 : vector<8x128xf32>
    %62 = arith.mulf %50, %61 : vector<8x128xf32>
    %63 = arith.addf %59, %62 : vector<8x128xf32>
    %64 = math.tanh %63 : vector<8x128xf32>
    %cst_17 = arith.constant 1.000000e+00 : f32
    %65 = vector.broadcast %cst_17 : f32 to vector<8x128xf32>
    %66 = arith.subf %65, %58 : vector<8x128xf32>
    %67 = arith.mulf %66, %64 : vector<8x128xf32>
    %68 = arith.mulf %58, %38 : vector<8x128xf32>
    %69 = arith.addf %67, %68 : vector<8x128xf32>
    %c2_i32 = arith.constant 2 : i32
    %70 = arith.index_cast %c2_i32 : i32 to index
    %c0_18 = arith.constant 0 : index
    %c0_19 = arith.constant 0 : index
    %71 = vector.load %arg2[%70, %c0_18, %c0_19] : memref<8x8x384xf32, #tpu.memory_space<vmem>>, vector<1x8x384xf32>
    %72 = vector.shape_cast %71 : vector<1x8x384xf32> to vector<8x384xf32>
    %cst_20 = arith.constant dense<0.000000e+00> : vector<8x384xf32>
    %73 = tpu.matmul %69, %3, %cst_20 {dimension_numbers = #tpu.dot_dimension_numbers<[1], [0], [0], [1], [0, 0, 1, 1], [], []>} : vector<8x128xf32>, vector<128x384xf32>, vector<8x384xf32> -> vector<8x384xf32>
    %74 = vector.extract_strided_slice %72 {offsets = [0, 0], sizes = [8, 128], strides = [1, 1]} : vector<8x384xf32> to vector<8x128xf32>
    %75 = vector.extract_strided_slice %73 {offsets = [0, 0], sizes = [8, 128], strides = [1, 1]} : vector<8x384xf32> to vector<8x128xf32>
    %76 = arith.addf %74, %75 : vector<8x128xf32>
    %77 = arith.negf %76 : vector<8x128xf32>
    %78 = math.exp %77 : vector<8x128xf32>
    %cst_21 = arith.constant 1.000000e+00 : f32
    %79 = vector.broadcast %cst_21 : f32 to vector<8x128xf32>
    %80 = arith.addf %79, %78 : vector<8x128xf32>
    %81 = arith.divf %79, %80 : vector<8x128xf32>
    %82 = vector.extract_strided_slice %72 {offsets = [0, 128], sizes = [8, 128], strides = [1, 1]} : vector<8x384xf32> to vector<8x128xf32>
    %83 = vector.extract_strided_slice %73 {offsets = [0, 128], sizes = [8, 128], strides = [1, 1]} : vector<8x384xf32> to vector<8x128xf32>
    %84 = arith.addf %82, %83 : vector<8x128xf32>
    %85 = arith.negf %84 : vector<8x128xf32>
    %86 = math.exp %85 : vector<8x128xf32>
    %cst_22 = arith.constant 1.000000e+00 : f32
    %87 = vector.broadcast %cst_22 : f32 to vector<8x128xf32>
    %88 = arith.addf %87, %86 : vector<8x128xf32>
    %89 = arith.divf %87, %88 : vector<8x128xf32>
    %90 = vector.extract_strided_slice %72 {offsets = [0, 256], sizes = [8, 128], strides = [1, 1]} : vector<8x384xf32> to vector<8x128xf32>
    %91 = vector.extract_strided_slice %73 {offsets = [0, 256], sizes = [8, 128], strides = [1, 1]} : vector<8x384xf32> to vector<8x128xf32>
    %92 = arith.addf %91, %6 : vector<8x128xf32>
    %93 = arith.mulf %81, %92 : vector<8x128xf32>
    %94 = arith.addf %90, %93 : vector<8x128xf32>
    %95 = math.tanh %94 : vector<8x128xf32>
    %cst_23 = arith.constant 1.000000e+00 : f32
    %96 = vector.broadcast %cst_23 : f32 to vector<8x128xf32>
    %97 = arith.subf %96, %89 : vector<8x128xf32>
    %98 = arith.mulf %97, %95 : vector<8x128xf32>
    %99 = arith.mulf %89, %69 : vector<8x128xf32>
    %100 = arith.addf %98, %99 : vector<8x128xf32>
    %c3_i32 = arith.constant 3 : i32
    %101 = arith.index_cast %c3_i32 : i32 to index
    %c0_24 = arith.constant 0 : index
    %c0_25 = arith.constant 0 : index
    %102 = vector.load %arg2[%101, %c0_24, %c0_25] : memref<8x8x384xf32, #tpu.memory_space<vmem>>, vector<1x8x384xf32>
    %103 = vector.shape_cast %102 : vector<1x8x384xf32> to vector<8x384xf32>
    %cst_26 = arith.constant dense<0.000000e+00> : vector<8x384xf32>
    %104 = tpu.matmul %100, %3, %cst_26 {dimension_numbers = #tpu.dot_dimension_numbers<[1], [0], [0], [1], [0, 0, 1, 1], [], []>} : vector<8x128xf32>, vector<128x384xf32>, vector<8x384xf32> -> vector<8x384xf32>
    %105 = vector.extract_strided_slice %103 {offsets = [0, 0], sizes = [8, 128], strides = [1, 1]} : vector<8x384xf32> to vector<8x128xf32>
    %106 = vector.extract_strided_slice %104 {offsets = [0, 0], sizes = [8, 128], strides = [1, 1]} : vector<8x384xf32> to vector<8x128xf32>
    %107 = arith.addf %105, %106 : vector<8x128xf32>
    %108 = arith.negf %107 : vector<8x128xf32>
    %109 = math.exp %108 : vector<8x128xf32>
    %cst_27 = arith.constant 1.000000e+00 : f32
    %110 = vector.broadcast %cst_27 : f32 to vector<8x128xf32>
    %111 = arith.addf %110, %109 : vector<8x128xf32>
    %112 = arith.divf %110, %111 : vector<8x128xf32>
    %113 = vector.extract_strided_slice %103 {offsets = [0, 128], sizes = [8, 128], strides = [1, 1]} : vector<8x384xf32> to vector<8x128xf32>
    %114 = vector.extract_strided_slice %104 {offsets = [0, 128], sizes = [8, 128], strides = [1, 1]} : vector<8x384xf32> to vector<8x128xf32>
    %115 = arith.addf %113, %114 : vector<8x128xf32>
    %116 = arith.negf %115 : vector<8x128xf32>
    %117 = math.exp %116 : vector<8x128xf32>
    %cst_28 = arith.constant 1.000000e+00 : f32
    %118 = vector.broadcast %cst_28 : f32 to vector<8x128xf32>
    %119 = arith.addf %118, %117 : vector<8x128xf32>
    %120 = arith.divf %118, %119 : vector<8x128xf32>
    %121 = vector.extract_strided_slice %103 {offsets = [0, 256], sizes = [8, 128], strides = [1, 1]} : vector<8x384xf32> to vector<8x128xf32>
    %122 = vector.extract_strided_slice %104 {offsets = [0, 256], sizes = [8, 128], strides = [1, 1]} : vector<8x384xf32> to vector<8x128xf32>
    %123 = arith.addf %122, %6 : vector<8x128xf32>
    %124 = arith.mulf %112, %123 : vector<8x128xf32>
    %125 = arith.addf %121, %124 : vector<8x128xf32>
    %126 = math.tanh %125 : vector<8x128xf32>
    %cst_29 = arith.constant 1.000000e+00 : f32
    %127 = vector.broadcast %cst_29 : f32 to vector<8x128xf32>
    %128 = arith.subf %127, %120 : vector<8x128xf32>
    %129 = arith.mulf %128, %126 : vector<8x128xf32>
    %130 = arith.mulf %120, %100 : vector<8x128xf32>
    %131 = arith.addf %129, %130 : vector<8x128xf32>
    %c4_i32 = arith.constant 4 : i32
    %132 = arith.index_cast %c4_i32 : i32 to index
    %c0_30 = arith.constant 0 : index
    %c0_31 = arith.constant 0 : index
    %133 = vector.load %arg2[%132, %c0_30, %c0_31] : memref<8x8x384xf32, #tpu.memory_space<vmem>>, vector<1x8x384xf32>
    %134 = vector.shape_cast %133 : vector<1x8x384xf32> to vector<8x384xf32>
    %cst_32 = arith.constant dense<0.000000e+00> : vector<8x384xf32>
    %135 = tpu.matmul %131, %3, %cst_32 {dimension_numbers = #tpu.dot_dimension_numbers<[1], [0], [0], [1], [0, 0, 1, 1], [], []>} : vector<8x128xf32>, vector<128x384xf32>, vector<8x384xf32> -> vector<8x384xf32>
    %136 = vector.extract_strided_slice %134 {offsets = [0, 0], sizes = [8, 128], strides = [1, 1]} : vector<8x384xf32> to vector<8x128xf32>
    %137 = vector.extract_strided_slice %135 {offsets = [0, 0], sizes = [8, 128], strides = [1, 1]} : vector<8x384xf32> to vector<8x128xf32>
    %138 = arith.addf %136, %137 : vector<8x128xf32>
    %139 = arith.negf %138 : vector<8x128xf32>
    %140 = math.exp %139 : vector<8x128xf32>
    %cst_33 = arith.constant 1.000000e+00 : f32
    %141 = vector.broadcast %cst_33 : f32 to vector<8x128xf32>
    %142 = arith.addf %141, %140 : vector<8x128xf32>
    %143 = arith.divf %141, %142 : vector<8x128xf32>
    %144 = vector.extract_strided_slice %134 {offsets = [0, 128], sizes = [8, 128], strides = [1, 1]} : vector<8x384xf32> to vector<8x128xf32>
    %145 = vector.extract_strided_slice %135 {offsets = [0, 128], sizes = [8, 128], strides = [1, 1]} : vector<8x384xf32> to vector<8x128xf32>
    %146 = arith.addf %144, %145 : vector<8x128xf32>
    %147 = arith.negf %146 : vector<8x128xf32>
    %148 = math.exp %147 : vector<8x128xf32>
    %cst_34 = arith.constant 1.000000e+00 : f32
    %149 = vector.broadcast %cst_34 : f32 to vector<8x128xf32>
    %150 = arith.addf %149, %148 : vector<8x128xf32>
    %151 = arith.divf %149, %150 : vector<8x128xf32>
    %152 = vector.extract_strided_slice %134 {offsets = [0, 256], sizes = [8, 128], strides = [1, 1]} : vector<8x384xf32> to vector<8x128xf32>
    %153 = vector.extract_strided_slice %135 {offsets = [0, 256], sizes = [8, 128], strides = [1, 1]} : vector<8x384xf32> to vector<8x128xf32>
    %154 = arith.addf %153, %6 : vector<8x128xf32>
    %155 = arith.mulf %143, %154 : vector<8x128xf32>
    %156 = arith.addf %152, %155 : vector<8x128xf32>
    %157 = math.tanh %156 : vector<8x128xf32>
    %cst_35 = arith.constant 1.000000e+00 : f32
    %158 = vector.broadcast %cst_35 : f32 to vector<8x128xf32>
    %159 = arith.subf %158, %151 : vector<8x128xf32>
    %160 = arith.mulf %159, %157 : vector<8x128xf32>
    %161 = arith.mulf %151, %131 : vector<8x128xf32>
    %162 = arith.addf %160, %161 : vector<8x128xf32>
    %c5_i32 = arith.constant 5 : i32
    %163 = arith.index_cast %c5_i32 : i32 to index
    %c0_36 = arith.constant 0 : index
    %c0_37 = arith.constant 0 : index
    %164 = vector.load %arg2[%163, %c0_36, %c0_37] : memref<8x8x384xf32, #tpu.memory_space<vmem>>, vector<1x8x384xf32>
    %165 = vector.shape_cast %164 : vector<1x8x384xf32> to vector<8x384xf32>
    %cst_38 = arith.constant dense<0.000000e+00> : vector<8x384xf32>
    %166 = tpu.matmul %162, %3, %cst_38 {dimension_numbers = #tpu.dot_dimension_numbers<[1], [0], [0], [1], [0, 0, 1, 1], [], []>} : vector<8x128xf32>, vector<128x384xf32>, vector<8x384xf32> -> vector<8x384xf32>
    %167 = vector.extract_strided_slice %165 {offsets = [0, 0], sizes = [8, 128], strides = [1, 1]} : vector<8x384xf32> to vector<8x128xf32>
    %168 = vector.extract_strided_slice %166 {offsets = [0, 0], sizes = [8, 128], strides = [1, 1]} : vector<8x384xf32> to vector<8x128xf32>
    %169 = arith.addf %167, %168 : vector<8x128xf32>
    %170 = arith.negf %169 : vector<8x128xf32>
    %171 = math.exp %170 : vector<8x128xf32>
    %cst_39 = arith.constant 1.000000e+00 : f32
    %172 = vector.broadcast %cst_39 : f32 to vector<8x128xf32>
    %173 = arith.addf %172, %171 : vector<8x128xf32>
    %174 = arith.divf %172, %173 : vector<8x128xf32>
    %175 = vector.extract_strided_slice %165 {offsets = [0, 128], sizes = [8, 128], strides = [1, 1]} : vector<8x384xf32> to vector<8x128xf32>
    %176 = vector.extract_strided_slice %166 {offsets = [0, 128], sizes = [8, 128], strides = [1, 1]} : vector<8x384xf32> to vector<8x128xf32>
    %177 = arith.addf %175, %176 : vector<8x128xf32>
    %178 = arith.negf %177 : vector<8x128xf32>
    %179 = math.exp %178 : vector<8x128xf32>
    %cst_40 = arith.constant 1.000000e+00 : f32
    %180 = vector.broadcast %cst_40 : f32 to vector<8x128xf32>
    %181 = arith.addf %180, %179 : vector<8x128xf32>
    %182 = arith.divf %180, %181 : vector<8x128xf32>
    %183 = vector.extract_strided_slice %165 {offsets = [0, 256], sizes = [8, 128], strides = [1, 1]} : vector<8x384xf32> to vector<8x128xf32>
    %184 = vector.extract_strided_slice %166 {offsets = [0, 256], sizes = [8, 128], strides = [1, 1]} : vector<8x384xf32> to vector<8x128xf32>
    %185 = arith.addf %184, %6 : vector<8x128xf32>
    %186 = arith.mulf %174, %185 : vector<8x128xf32>
    %187 = arith.addf %183, %186 : vector<8x128xf32>
    %188 = math.tanh %187 : vector<8x128xf32>
    %cst_41 = arith.constant 1.000000e+00 : f32
    %189 = vector.broadcast %cst_41 : f32 to vector<8x128xf32>
    %190 = arith.subf %189, %182 : vector<8x128xf32>
    %191 = arith.mulf %190, %188 : vector<8x128xf32>
    %192 = arith.mulf %182, %162 : vector<8x128xf32>
    %193 = arith.addf %191, %192 : vector<8x128xf32>
    %c6_i32 = arith.constant 6 : i32
    %194 = arith.index_cast %c6_i32 : i32 to index
    %c0_42 = arith.constant 0 : index
    %c0_43 = arith.constant 0 : index
    %195 = vector.load %arg2[%194, %c0_42, %c0_43] : memref<8x8x384xf32, #tpu.memory_space<vmem>>, vector<1x8x384xf32>
    %196 = vector.shape_cast %195 : vector<1x8x384xf32> to vector<8x384xf32>
    %cst_44 = arith.constant dense<0.000000e+00> : vector<8x384xf32>
    %197 = tpu.matmul %193, %3, %cst_44 {dimension_numbers = #tpu.dot_dimension_numbers<[1], [0], [0], [1], [0, 0, 1, 1], [], []>} : vector<8x128xf32>, vector<128x384xf32>, vector<8x384xf32> -> vector<8x384xf32>
    %198 = vector.extract_strided_slice %196 {offsets = [0, 0], sizes = [8, 128], strides = [1, 1]} : vector<8x384xf32> to vector<8x128xf32>
    %199 = vector.extract_strided_slice %197 {offsets = [0, 0], sizes = [8, 128], strides = [1, 1]} : vector<8x384xf32> to vector<8x128xf32>
    %200 = arith.addf %198, %199 : vector<8x128xf32>
    %201 = arith.negf %200 : vector<8x128xf32>
    %202 = math.exp %201 : vector<8x128xf32>
    %cst_45 = arith.constant 1.000000e+00 : f32
    %203 = vector.broadcast %cst_45 : f32 to vector<8x128xf32>
    %204 = arith.addf %203, %202 : vector<8x128xf32>
    %205 = arith.divf %203, %204 : vector<8x128xf32>
    %206 = vector.extract_strided_slice %196 {offsets = [0, 128], sizes = [8, 128], strides = [1, 1]} : vector<8x384xf32> to vector<8x128xf32>
    %207 = vector.extract_strided_slice %197 {offsets = [0, 128], sizes = [8, 128], strides = [1, 1]} : vector<8x384xf32> to vector<8x128xf32>
    %208 = arith.addf %206, %207 : vector<8x128xf32>
    %209 = arith.negf %208 : vector<8x128xf32>
    %210 = math.exp %209 : vector<8x128xf32>
    %cst_46 = arith.constant 1.000000e+00 : f32
    %211 = vector.broadcast %cst_46 : f32 to vector<8x128xf32>
    %212 = arith.addf %211, %210 : vector<8x128xf32>
    %213 = arith.divf %211, %212 : vector<8x128xf32>
    %214 = vector.extract_strided_slice %196 {offsets = [0, 256], sizes = [8, 128], strides = [1, 1]} : vector<8x384xf32> to vector<8x128xf32>
    %215 = vector.extract_strided_slice %197 {offsets = [0, 256], sizes = [8, 128], strides = [1, 1]} : vector<8x384xf32> to vector<8x128xf32>
    %216 = arith.addf %215, %6 : vector<8x128xf32>
    %217 = arith.mulf %205, %216 : vector<8x128xf32>
    %218 = arith.addf %214, %217 : vector<8x128xf32>
    %219 = math.tanh %218 : vector<8x128xf32>
    %cst_47 = arith.constant 1.000000e+00 : f32
    %220 = vector.broadcast %cst_47 : f32 to vector<8x128xf32>
    %221 = arith.subf %220, %213 : vector<8x128xf32>
    %222 = arith.mulf %221, %219 : vector<8x128xf32>
    %223 = arith.mulf %213, %193 : vector<8x128xf32>
    %224 = arith.addf %222, %223 : vector<8x128xf32>
    %c7_i32 = arith.constant 7 : i32
    %225 = arith.index_cast %c7_i32 : i32 to index
    %c0_48 = arith.constant 0 : index
    %c0_49 = arith.constant 0 : index
    %226 = vector.load %arg2[%225, %c0_48, %c0_49] : memref<8x8x384xf32, #tpu.memory_space<vmem>>, vector<1x8x384xf32>
    %227 = vector.shape_cast %226 : vector<1x8x384xf32> to vector<8x384xf32>
    %cst_50 = arith.constant dense<0.000000e+00> : vector<8x384xf32>
    %228 = tpu.matmul %224, %3, %cst_50 {dimension_numbers = #tpu.dot_dimension_numbers<[1], [0], [0], [1], [0, 0, 1, 1], [], []>} : vector<8x128xf32>, vector<128x384xf32>, vector<8x384xf32> -> vector<8x384xf32>
    %229 = vector.extract_strided_slice %227 {offsets = [0, 0], sizes = [8, 128], strides = [1, 1]} : vector<8x384xf32> to vector<8x128xf32>
    %230 = vector.extract_strided_slice %228 {offsets = [0, 0], sizes = [8, 128], strides = [1, 1]} : vector<8x384xf32> to vector<8x128xf32>
    %231 = arith.addf %229, %230 : vector<8x128xf32>
    %232 = arith.negf %231 : vector<8x128xf32>
    %233 = math.exp %232 : vector<8x128xf32>
    %cst_51 = arith.constant 1.000000e+00 : f32
    %234 = vector.broadcast %cst_51 : f32 to vector<8x128xf32>
    %235 = arith.addf %234, %233 : vector<8x128xf32>
    %236 = arith.divf %234, %235 : vector<8x128xf32>
    %237 = vector.extract_strided_slice %227 {offsets = [0, 128], sizes = [8, 128], strides = [1, 1]} : vector<8x384xf32> to vector<8x128xf32>
    %238 = vector.extract_strided_slice %228 {offsets = [0, 128], sizes = [8, 128], strides = [1, 1]} : vector<8x384xf32> to vector<8x128xf32>
    %239 = arith.addf %237, %238 : vector<8x128xf32>
    %240 = arith.negf %239 : vector<8x128xf32>
    %241 = math.exp %240 : vector<8x128xf32>
    %cst_52 = arith.constant 1.000000e+00 : f32
    %242 = vector.broadcast %cst_52 : f32 to vector<8x128xf32>
    %243 = arith.addf %242, %241 : vector<8x128xf32>
    %244 = arith.divf %242, %243 : vector<8x128xf32>
    %245 = vector.extract_strided_slice %227 {offsets = [0, 256], sizes = [8, 128], strides = [1, 1]} : vector<8x384xf32> to vector<8x128xf32>
    %246 = vector.extract_strided_slice %228 {offsets = [0, 256], sizes = [8, 128], strides = [1, 1]} : vector<8x384xf32> to vector<8x128xf32>
    %247 = arith.addf %246, %6 : vector<8x128xf32>
    %248 = arith.mulf %236, %247 : vector<8x128xf32>
    %249 = arith.addf %245, %248 : vector<8x128xf32>
    %250 = math.tanh %249 : vector<8x128xf32>
    %cst_53 = arith.constant 1.000000e+00 : f32
    %251 = vector.broadcast %cst_53 : f32 to vector<8x128xf32>
    %252 = arith.subf %251, %244 : vector<8x128xf32>
    %253 = arith.mulf %252, %250 : vector<8x128xf32>
    %254 = arith.mulf %244, %224 : vector<8x128xf32>
    %255 = arith.addf %253, %254 : vector<8x128xf32>
    %c8_i32 = arith.constant 8 : i32
    %c0_54 = arith.constant 0 : index
    %c0_55 = arith.constant 0 : index
    %256 = vector.load %arg8[%c0_54, %c0_55] : memref<8x128xf32, #tpu.memory_space<vmem>>, vector<8x128xf32>
    tpu.vector_store %arg8[%c0_54, %c0_55], %255 {strides = array<i32>} : memref<8x128xf32, #tpu.memory_space<vmem>>, vector<8x128xf32>,
    %c0_i32_56 = arith.constant 0 : i32
    %257 = arith.cmpi eq, %arg1, %c0_i32_56 : i32
    %258 = arith.extui %257 : i1 to i32
    %c0_i32_57 = arith.constant 0 : i32
    %259 = arith.cmpi ne, %258, %c0_i32_57 : i32
    scf.if %259 {
      %c0_58 = arith.constant 0 : index
      %c0_59 = arith.constant 0 : index
      %260 = vector.load %arg5[%c0_58, %c0_59] : memref<128x128xf32, #tpu.memory_space<vmem>>, vector<128x128xf32>
      %cst_60 = arith.constant dense<0.000000e+00> : vector<8x128xf32>
      %261 = tpu.matmul %255, %260, %cst_60 {dimension_numbers = #tpu.dot_dimension_numbers<[1], [0], [0], [1], [0, 0, 1, 1], [], []>} : vector<8x128xf32>, vector<128x128xf32>, vector<8x128xf32> -> vector<8x128xf32>
      %c0_61 = arith.constant 0 : index
      %c0_62 = arith.constant 0 : index
      %262 = vector.load %arg6[%c0_61, %c0_62] : memref<1x128xf32, #tpu.memory_space<vmem>>, vector<1x128xf32>
      %263 = vector.broadcast %262 : vector<1x128xf32> to vector<8x128xf32>
      %264 = arith.addf %261, %263 : vector<8x128xf32>
      %cst_63 = arith.constant 0.000000e+00 : f32
      %265 = vector.broadcast %cst_63 : f32 to vector<8x128xf32>
      %266 = arith.cmpf oge, %264, %265 : vector<8x128xf32>
      %cst_64 = arith.constant 0.00999999977 : f32
      %267 = vector.broadcast %cst_64 : f32 to vector<8x128xf32>
      %268 = arith.mulf %267, %264 : vector<8x128xf32>
      %269 = arith.select %266, %264, %268 : vector<8x128xi1>, vector<8x128xf32>
      %c0_65 = arith.constant 0 : index
      %c0_66 = arith.constant 0 : index
      %270 = vector.load %arg7[%c0_65, %c0_66] : memref<8x128xf32, #tpu.memory_space<vmem>>, vector<8x128xf32>
      tpu.vector_store %arg7[%c0_65, %c0_66], %269 {strides = array<i32>} : memref<8x128xf32, #tpu.memory_space<vmem>>, vector<8x128xf32>,
    } else {
    }
    return
  }
  func.func @transform_0(%arg0: i32, %arg1: i32) -> (i32, i32, i32) {
    %c0_i32 = arith.constant 0 : i32
    %c0_i32_0 = arith.constant 0 : i32
    return %arg1, %arg0, %c0_i32 : i32, i32, i32
  }
  func.func @transform_1(%arg0: i32, %arg1: i32) -> (i32, i32) {
    %c0_i32 = arith.constant 0 : i32
    %c0_i32_0 = arith.constant 0 : i32
    %c0_i32_1 = arith.constant 0 : i32
    return %c0_i32, %c0_i32_0 : i32, i32
  }
  func.func @transform_2(%arg0: i32, %arg1: i32) -> (i32, i32) {
    %c0_i32 = arith.constant 0 : i32
    %c0_i32_0 = arith.constant 0 : i32
    %c0_i32_1 = arith.constant 0 : i32
    return %c0_i32, %c0_i32_0 : i32, i32
  }
  func.func @transform_3(%arg0: i32, %arg1: i32) -> (i32, i32) {
    %c0_i32 = arith.constant 0 : i32
    %c0_i32_0 = arith.constant 0 : i32
    %c0_i32_1 = arith.constant 0 : i32
    return %c0_i32, %c0_i32_0 : i32, i32
  }
  func.func @transform_4(%arg0: i32, %arg1: i32) -> (i32, i32) {
    %c0_i32 = arith.constant 0 : i32
    %c0_i32_0 = arith.constant 0 : i32
    %c0_i32_1 = arith.constant 0 : i32
    return %c0_i32, %c0_i32_0 : i32, i32
  }
  func.func @transform_5(%arg0: i32, %arg1: i32) -> (i32, i32) {
    %c0_i32 = arith.constant 0 : i32
    %c0_i32_0 = arith.constant 0 : i32
    return %arg0, %c0_i32 : i32, i32
  }
}

</mosaic_0001>

<llo_original>
// kernel: tpu_custom_call.1
$region0: #{tpu_custom_call.1}
  #allocation0 [shape = 'u32[]', space=smem, size = 0x4, offset = 0x4, fixed_abs, tag = 'smem constant byte address 0x4 - core index']
  #allocation1 [shape = 'u32[72,128]{1,0:T(1,128)}', space=vmem, size = 0x9000, scoped, tag = 'internal scratch']
  #allocation2 [shape = 'f32[8,128]{1,0:T(8,128)}', space=vmem, size = 0x1000, scoped, tag = 'scratch operand']
  %s0 = inlined_call_operand.hbm [shape: f32[8,8,384], index: 0, kind: input, shape index: {}]
  %s1 = inlined_call_operand.hbm [shape: f32[128,384], index: 1, kind: input, shape index: {}]
  %s2 = inlined_call_operand.vmem [shape: f32[1,128], index: 2, kind: input, shape index: {}]
  %s3 = inlined_call_operand.hbm [shape: f32[128,128], index: 3, kind: input, shape index: {}]
  %s4 = inlined_call_operand.vmem [shape: f32[1,128], index: 4, kind: input, shape index: {}]
  %s5 = inlined_call_operand.hbm [shape: f32[8,128], index: 5, kind: output, shape index: {}]
  %s6 = sld [smem:[#allocation0]]
  $region50: #{tpu_custom_call.1} parent=0
    _
  %s8 = ssub.s32 1, %s6
  %s9 = scalar_select 0, %s8, %s6
  $region1: #{tpu_custom_call.1} parent=0
    #allocation3 [shape = 'u8[98304]{0}', space=vmem, size = 0x18000, scoped, tag = 'input window, operand 0, single buffered']
    #allocation4 [shape = 's32[1]{0}', space=sflag, size = 0x4, scoped, tag = 'scoped memory for tpu_custom_call.1']
    #allocation5 [shape = 's32[1]{0}', space=sflag, size = 0x4, scoped, tag = 'scoped memory for tpu_custom_call.1']
    #allocation6 [shape = 'u8[196608]{0}', space=vmem, size = 0x30000, scoped, tag = 'input window, operand 1, single buffered']
    #allocation7 [shape = 's32[1]{0}', space=sflag, size = 0x4, scoped, tag = 'scoped memory for tpu_custom_call.1']
    #allocation8 [shape = 'u8[65536]{0}', space=vmem, size = 0x10000, scoped, tag = 'input window, operand 3, single buffered']
    #allocation9 [shape = 'u8[4096]{0}', space=vmem, size = 0x1000, scoped, tag = 'output window, operand 0, single buffered']
    %10 = vsyncpa [#allocation4], 0
    %11 = vsyncpa [#allocation7], 0
    %12 = vsyncpa [#allocation5], 0
    // Predicated region
    $region2: #{tpu_custom_call.1} parent=1 // pred_check
      _
    $region3: #{tpu_custom_call.1} parent=1 // pred_check_branch
      %14 = sbr.rel (0) target = $region5
    $region4: #{tpu_custom_call.1} parent=1 // pred_region
      %16 = vsyncadd [#allocation4], 0
      %s17 = sshll.u32 %s0, 4
      %s18 = int_to_ptr.hbm [resolvable:$true] %s17
      %s19 = sshll.u32 [#allocation3], 4
      %s20 = int_to_ptr.vmem [resolvable:$true] %s19
      %25 = dma.hbm_to_vmem [thread:$0]  %s18, 3072, %s20, [#allocation4], 384, 384, 24
    $region5: #{tpu_custom_call.1} parent=1 // pred_fallthru
      _
    // Predicated region
    $region6: #{tpu_custom_call.1} parent=1 // pred_check
      _
    $region7: #{tpu_custom_call.1} parent=1 // pred_check_branch
      %27 = sbr.rel (0) target = $region9
    $region8: #{tpu_custom_call.1} parent=1 // pred_region
      %29 = vsyncadd [#allocation7], 0
      %s30 = sshll.u32 %s1, 4
      %s31 = int_to_ptr.hbm [resolvable:$true] %s30
      %s32 = sshll.u32 [#allocation6], 4
      %s33 = int_to_ptr.vmem [resolvable:$true] %s32
      %38 = dma.hbm_to_vmem [thread:$0]  %s31, 6144, %s33, [#allocation7], 384, 384, 24
    $region9: #{tpu_custom_call.1} parent=1 // pred_fallthru
      _
    // Predicated region
    $region10: #{tpu_custom_call.1} parent=1 // pred_check
      _
    $region11: #{tpu_custom_call.1} parent=1 // pred_check_branch
      %40 = sbr.rel (0) target = $region13
    $region12: #{tpu_custom_call.1} parent=1 // pred_region
      _
    $region13: #{tpu_custom_call.1} parent=1 // pred_fallthru
      _
    // Predicated region
    $region14: #{tpu_custom_call.1} parent=1 // pred_check
      _
    $region15: #{tpu_custom_call.1} parent=1 // pred_check_branch
      %42 = sbr.rel (0) target = $region17
    $region16: #{tpu_custom_call.1} parent=1 // pred_region
      %44 = vsyncadd [#allocation7], 0
      %s45 = sshll.u32 %s3, 4
      %s46 = int_to_ptr.hbm [resolvable:$true] %s45
      %s47 = sshll.u32 [#allocation8], 4
      %s48 = int_to_ptr.vmem [resolvable:$true] %s47
      %53 = dma.hbm_to_vmem [thread:$0]  %s46, 2048, %s48, [#allocation7], 128, 128, 8
    $region17: #{tpu_custom_call.1} parent=1 // pred_fallthru
      _
    // Predicated region
    $region18: #{tpu_custom_call.1} parent=1 // pred_check
      _
    $region19: #{tpu_custom_call.1} parent=1 // pred_check_branch
      %55 = sbr.rel (0) target = $region21
    $region20: #{tpu_custom_call.1} parent=1 // pred_region
      _
    $region21: #{tpu_custom_call.1} parent=1 // pred_fallthru
      _
    // Predicated region
    $region22: #{tpu_custom_call.1} parent=1 // pred_check
      _
    $region23: #{tpu_custom_call.1} parent=1 // pred_check_branch
      %57 = sbr.rel (0) target = $region25
    $region24: #{tpu_custom_call.1} parent=1 // pred_region
      %59 = dma.done [#allocation4], 3072
    $region25: #{tpu_custom_call.1} parent=1 // pred_fallthru
      _
    // Predicated region
    $region26: #{tpu_custom_call.1} parent=1 // pred_check
      _
    $region27: #{tpu_custom_call.1} parent=1 // pred_check_branch
      %61 = sbr.rel (0) target = $region29
    $region28: #{tpu_custom_call.1} parent=1 // pred_region
      %63 = dma.done [#allocation7], 6144
    $region29: #{tpu_custom_call.1} parent=1 // pred_fallthru
      _
    // Predicated region
    $region30: #{tpu_custom_call.1} parent=1 // pred_check
      _
    $region31: #{tpu_custom_call.1} parent=1 // pred_check_branch
      %65 = sbr.rel (0) target = $region33
    $region32: #{tpu_custom_call.1} parent=1 // pred_region
      %67 = dma.done [#allocation7], 2048
    $region33: #{tpu_custom_call.1} parent=1 // pred_fallthru
      _
    %p68 = scmp.eq.s32.totalorder 0, 0
    // Predicated region
    $region34: #{tpu_custom_call.1} parent=1 // pred_check
      %p69 = pneg %p68
    $region35: #{tpu_custom_call.1} parent=1 // pred_check_branch
      %71 = sbr.rel (%p69) target = $region37
    $region36: #{tpu_custom_call.1} parent=1 // pred_region
      %72 = vst [vmem:[#allocation2] sm:$0xff] 0.0
    $region37: #{tpu_custom_call.1} parent=1 // pred_fallthru
      _
    %v73 = vld [vmem:[#allocation6] sm:$0xff]
    %v74 = vld [vmem:[#allocation6 + $0x8] sm:$0xff]
    %v75 = vld [vmem:[#allocation6 + $0x10] sm:$0xff]
    %v76 = vld [vmem:[#allocation6 + $0x18] sm:$0xff]
    %v77 = vld [vmem:[#allocation6 + $0x20] sm:$0xff]
    %v78 = vld [vmem:[#allocation6 + $0x28] sm:$0xff]
    %v79 = vld [vmem:[#allocation6 + $0x30] sm:$0xff]
    %v80 = vld [vmem:[#allocation6 + $0x38] sm:$0xff]
    %v81 = vld [vmem:[#allocation6 + $0x40] sm:$0xff]
    %v82 = vld [vmem:[#allocation6 + $0x48] sm:$0xff]
    %v83 = vld [vmem:[#allocation6 + $0x50] sm:$0xff]
    %v84 = vld [vmem:[#allocation6 + $0x58] sm:$0xff]
    %v85 = vld [vmem:[#allocation6 + $0x60] sm:$0xff]
    %v86 = vld [vmem:[#allocation6 + $0x68] sm:$0xff]
    %v87 = vld [vmem:[#allocation6 + $0x70] sm:$0xff]
    %v88 = vld [vmem:[#allocation6 + $0x78] sm:$0xff]
    %v89 = vld [vmem:[#allocation6 + $0x80] sm:$0xff]
    %v90 = vld [vmem:[#allocation6 + $0x88] sm:$0xff]
    %v91 = vld [vmem:[#allocation6 + $0x90] sm:$0xff]
    %v92 = vld [vmem:[#allocation6 + $0x98] sm:$0xff]
    %v93 = vld [vmem:[#allocation6 + $0xa0] sm:$0xff]
    %v94 = vld [vmem:[#allocation6 + $0xa8] sm:$0xff]
    %v95 = vld [vmem:[#allocation6 + $0xb0] sm:$0xff]
    %v96 = vld [vmem:[#allocation6 + $0xb8] sm:$0xff]
    %v97 = vld [vmem:[#allocation6 + $0xc0] sm:$0xff]
    %v98 = vld [vmem:[#allocation6 + $0xc8] sm:$0xff]
    %v99 = vld [vmem:[#allocation6 + $0xd0] sm:$0xff]
    %v100 = vld [vmem:[#allocation6 + $0xd8] sm:$0xff]
    %v101 = vld [vmem:[#allocation6 + $0xe0] sm:$0xff]
    %v102 = vld [vmem:[#allocation6 + $0xe8] sm:$0xff]
    %v103 = vld [vmem:[#allocation6 + $0xf0] sm:$0xff]
    %v104 = vld [vmem:[#allocation6 + $0xf8] sm:$0xff]
    %v105 = vld [vmem:[#allocation6 + $0x100] sm:$0xff]
    %v106 = vld [vmem:[#allocation6 + $0x108] sm:$0xff]
    %v107 = vld [vmem:[#allocation6 + $0x110] sm:$0xff]
    %v108 = vld [vmem:[#allocation6 + $0x118] sm:$0xff]
    %v109 = vld [vmem:[#allocation6 + $0x120] sm:$0xff]
    %v110 = vld [vmem:[#allocation6 + $0x128] sm:$0xff]
    %v111 = vld [vmem:[#allocation6 + $0x130] sm:$0xff]
    %v112 = vld [vmem:[#allocation6 + $0x138] sm:$0xff]
    %v113 = vld [vmem:[#allocation6 + $0x140] sm:$0xff]
    %v114 = vld [vmem:[#allocation6 + $0x148] sm:$0xff]
    %v115 = vld [vmem:[#allocation6 + $0x150] sm:$0xff]
    %v116 = vld [vmem:[#allocation6 + $0x158] sm:$0xff]
    %v117 = vld [vmem:[#allocation6 + $0x160] sm:$0xff]
    %v118 = vld [vmem:[#allocation6 + $0x168] sm:$0xff]
    %v119 = vld [vmem:[#allocation6 + $0x170] sm:$0xff]
    %v120 = vld [vmem:[#allocation6 + $0x178] sm:$0xff]
    %v121 = vld [vmem:[%s2] sm:$0x1]
    %v123 = vperm.slane %v121, 0
    %v125 = vld [vmem:[#allocation2] sm:$0xff]
    %v126 = vld [vmem:[#allocation3] sm:$0xff]
    %v127 = vld [vmem:[#allocation3 + $0x8] sm:$0xff]
    %v128 = vld [vmem:[#allocation3 + $0x10] sm:$0xff]
    %129 = vmatpush.msra.mxu0 %v118
    %130 = vmatpush.msra.mxu0 %v115
    %131 = vmatpush.msra.mxu0 %v112
    %132 = vmatpush.msra.mxu0 %v109
    %133 = vmatpush.msra.mxu0 %v106
    %134 = vmatpush.msra.mxu0 %v103
    %135 = vmatpush.msra.mxu0 %v100
    %136 = vmatpush.msra.mxu0 %v97
    %137 = vmatpush.msra.mxu0 %v94
    %138 = vmatpush.msra.mxu0 %v91
    %139 = vmatpush.msra.mxu0 %v88
    %140 = vmatpush.msra.mxu0 %v85
    %141 = vmatpush.msra.mxu0 %v82
    %142 = vmatpush.msra.mxu0 %v79
    %143 = vmatpush.msra.mxu0 %v76
    %144 = vmatpush.msra.mxu0 %v73
    %145 = vmatmul.f32.gmra.mxu0 %v125
    %v146 = vpop.f32.mrf.mxu0
    %v147 = vadd.f32 0.0, %v146
    %148 = vdwg.mxu0
    %149 = vmatpush.msra.mxu0 %v119
    %150 = vmatpush.msra.mxu0 %v116
    %151 = vmatpush.msra.mxu0 %v113
    %152 = vmatpush.msra.mxu0 %v110
    %153 = vmatpush.msra.mxu0 %v107
    %154 = vmatpush.msra.mxu0 %v104
    %155 = vmatpush.msra.mxu0 %v101
    %156 = vmatpush.msra.mxu0 %v98
    %157 = vmatpush.msra.mxu0 %v95
    %158 = vmatpush.msra.mxu0 %v92
    %159 = vmatpush.msra.mxu0 %v89
    %160 = vmatpush.msra.mxu0 %v86
    %161 = vmatpush.msra.mxu0 %v83
    %162 = vmatpush.msra.mxu0 %v80
    %163 = vmatpush.msra.mxu0 %v77
    %164 = vmatpush.msra.mxu0 %v74
    %165 = vmatmul.f32.gmra.mxu0 %v125
    %v166 = vpop.f32.mrf.mxu0
    %v167 = vadd.f32 0.0, %v166
    %168 = vdwg.mxu0
    %169 = vmatpush.msra.mxu0 %v120
    %170 = vmatpush.msra.mxu0 %v117
    %171 = vmatpush.msra.mxu0 %v114
    %172 = vmatpush.msra.mxu0 %v111
    %173 = vmatpush.msra.mxu0 %v108
    %174 = vmatpush.msra.mxu0 %v105
    %175 = vmatpush.msra.mxu0 %v102
    %176 = vmatpush.msra.mxu0 %v99
    %177 = vmatpush.msra.mxu0 %v96
    %178 = vmatpush.msra.mxu0 %v93
    %179 = vmatpush.msra.mxu0 %v90
    %180 = vmatpush.msra.mxu0 %v87
    %181 = vmatpush.msra.mxu0 %v84
    %182 = vmatpush.msra.mxu0 %v81
    %183 = vmatpush.msra.mxu0 %v78
    %184 = vmatpush.msra.mxu0 %v75
    %185 = vmatmul.f32.gmra.mxu0 %v125
    %v186 = vpop.f32.mrf.mxu0
    %v187 = vadd.f32 0.0, %v186
    %188 = vdwg.mxu0
    %v189 = vadd.f32 %v126, %v147
    %v190 = vxor.u32 %v189, 2147483648
    %v191 = vmul.f32 %v190, 1.442695
    %v192 = vpow.pop %v191
    %v193 = vadd.f32 %v192, 1.0
    %v194 = vrcp.pop %v193
    %v195 = vmul.f32 %v193, %v194
    %v196 = vsub.f32 1.0, %v195
    %v197 = vmul.f32 %v194, %v196
    %v198 = vadd.f32 %v194, %v197
    %vm199 = vweird.f32 %v193
    %vm200 = vweird.f32 %v194
    %vm201 = vmor %vm199, %vm200
    %v202 = vsel %vm201, %v194, %v198
    %v203 = vand.u32 2147483647, %v193
    %vm204 = vcmp.eq.f32.partialorder %v203, 8.507059e+37
    %v205 = vand.u32 %v193, 2147483648
    %v206 = vor.u32 1.1754944e-38, %v205
    %v207 = vsel %vm204, %v206, %v202
    %v208 = vmul.f32 1.0, %v207
    %v209 = vadd.f32 %v127, %v167
    %v210 = vxor.u32 %v209, 2147483648
    %v211 = vmul.f32 %v210, 1.442695
    %v212 = vpow.pop %v211
    %v213 = vadd.f32 %v212, 1.0
    %v214 = vrcp.pop %v213
    %v215 = vmul.f32 %v213, %v214
    %v216 = vsub.f32 1.0, %v215
    %v217 = vmul.f32 %v214, %v216
    %v218 = vadd.f32 %v214, %v217
    %vm219 = vweird.f32 %v213
    %vm220 = vweird.f32 %v214
    %vm221 = vmor %vm219, %vm220
    %v222 = vsel %vm221, %v214, %v218
    %v223 = vand.u32 2147483647, %v213
    %vm224 = vcmp.eq.f32.partialorder %v223, 8.507059e+37
    %v225 = vand.u32 %v213, 2147483648
    %v226 = vor.u32 1.1754944e-38, %v225
    %v227 = vsel %vm224, %v226, %v222
    %v228 = vmul.f32 1.0, %v227
    %v229 = vadd.f32 %v187, %v123
    %v230 = vmul.f32 %v208, %v229
    %v231 = vadd.f32 %v128, %v230
    %v232 = vtanh.pop %v231
    %v233 = vsub.f32 1.0, %v228
    %v234 = vmul.f32 %v233, %v232
    %v235 = vmul.f32 %v228, %v125
    %v236 = vadd.f32 %v234, %v235
    %s237 = scalar_lea.vmem [#allocation3], 24
    %v238 = vld [vmem:[%s237] sm:$0xff]
    %v239 = vld [vmem:[%s237 + $0x8] sm:$0xff]
    %v240 = vld [vmem:[%s237 + $0x10] sm:$0xff]
    %241 = vmatpush.msra.mxu0 %v118
    %242 = vmatpush.msra.mxu0 %v115
    %243 = vmatpush.msra.mxu0 %v112
    %244 = vmatpush.msra.mxu0 %v109
    %245 = vmatpush.msra.mxu0 %v106
    %246 = vmatpush.msra.mxu0 %v103
    %247 = vmatpush.msra.mxu0 %v100
    %248 = vmatpush.msra.mxu0 %v97
    %249 = vmatpush.msra.mxu0 %v94
    %250 = vmatpush.msra.mxu0 %v91
    %251 = vmatpush.msra.mxu0 %v88
    %252 = vmatpush.msra.mxu0 %v85
    %253 = vmatpush.msra.mxu0 %v82
    %254 = vmatpush.msra.mxu0 %v79
    %255 = vmatpush.msra.mxu0 %v76
    %256 = vmatpush.msra.mxu0 %v73
    %257 = vmatmul.f32.gmra.mxu0 %v236
    %v258 = vpop.f32.mrf.mxu0
    %v259 = vadd.f32 0.0, %v258
    %260 = vdwg.mxu0
    %261 = vmatpush.msra.mxu0 %v119
    %262 = vmatpush.msra.mxu0 %v116
    %263 = vmatpush.msra.mxu0 %v113
    %264 = vmatpush.msra.mxu0 %v110
    %265 = vmatpush.msra.mxu0 %v107
    %266 = vmatpush.msra.mxu0 %v104
    %267 = vmatpush.msra.mxu0 %v101
    %268 = vmatpush.msra.mxu0 %v98
    %269 = vmatpush.msra.mxu0 %v95
    %270 = vmatpush.msra.mxu0 %v92
    %271 = vmatpush.msra.mxu0 %v89
    %272 = vmatpush.msra.mxu0 %v86
    %273 = vmatpush.msra.mxu0 %v83
    %274 = vmatpush.msra.mxu0 %v80
    %275 = vmatpush.msra.mxu0 %v77
    %276 = vmatpush.msra.mxu0 %v74
    %277 = vmatmul.f32.gmra.mxu0 %v236
    %v278 = vpop.f32.mrf.mxu0
    %v279 = vadd.f32 0.0, %v278
    %280 = vdwg.mxu0
    %281 = vmatpush.msra.mxu0 %v120
    %282 = vmatpush.msra.mxu0 %v117
    %283 = vmatpush.msra.mxu0 %v114
    %284 = vmatpush.msra.mxu0 %v111
    %285 = vmatpush.msra.mxu0 %v108
    %286 = vmatpush.msra.mxu0 %v105
    %287 = vmatpush.msra.mxu0 %v102
    %288 = vmatpush.msra.mxu0 %v99
    %289 = vmatpush.msra.mxu0 %v96
    %290 = vmatpush.msra.mxu0 %v93
    %291 = vmatpush.msra.mxu0 %v90
    %292 = vmatpush.msra.mxu0 %v87
    %293 = vmatpush.msra.mxu0 %v84
    %294 = vmatpush.msra.mxu0 %v81
    %295 = vmatpush.msra.mxu0 %v78
    %296 = vmatpush.msra.mxu0 %v75
    %297 = vmatmul.f32.gmra.mxu0 %v236
    %v298 = vpop.f32.mrf.mxu0
    %v299 = vadd.f32 0.0, %v298
    %300 = vdwg.mxu0
    %v301 = vadd.f32 %v238, %v259
    %v302 = vxor.u32 %v301, 2147483648
    %v303 = vmul.f32 %v302, 1.442695
    %v304 = vpow.pop %v303
    %v305 = vadd.f32 %v304, 1.0
    %v306 = vrcp.pop %v305
    %v307 = vmul.f32 %v305, %v306
    %v308 = vsub.f32 1.0, %v307
    %v309 = vmul.f32 %v306, %v308
    %v310 = vadd.f32 %v306, %v309
    %vm311 = vweird.f32 %v305
    %vm312 = vweird.f32 %v306
    %vm313 = vmor %vm311, %vm312
    %v314 = vsel %vm313, %v306, %v310
    %v315 = vand.u32 2147483647, %v305
    %vm316 = vcmp.eq.f32.partialorder %v315, 8.507059e+37
    %v317 = vand.u32 %v305, 2147483648
    %v318 = vor.u32 1.1754944e-38, %v317
    %v319 = vsel %vm316, %v318, %v314
    %v320 = vmul.f32 1.0, %v319
    %v321 = vadd.f32 %v239, %v279
    %v322 = vxor.u32 %v321, 2147483648
    %v323 = vmul.f32 %v322, 1.442695
    %v324 = vpow.pop %v323
    %v325 = vadd.f32 %v324, 1.0
    %v326 = vrcp.pop %v325
    %v327 = vmul.f32 %v325, %v326
    %v328 = vsub.f32 1.0, %v327
    %v329 = vmul.f32 %v326, %v328
    %v330 = vadd.f32 %v326, %v329
    %vm331 = vweird.f32 %v325
    %vm332 = vweird.f32 %v326
    %vm333 = vmor %vm331, %vm332
    %v334 = vsel %vm333, %v326, %v330
    %v335 = vand.u32 2147483647, %v325
    %vm336 = vcmp.eq.f32.partialorder %v335, 8.507059e+37
    %v337 = vand.u32 %v325, 2147483648
    %v338 = vor.u32 1.1754944e-38, %v337
    %v339 = vsel %vm336, %v338, %v334
    %v340 = vmul.f32 1.0, %v339
    %v341 = vadd.f32 %v299, %v123
    %v342 = vmul.f32 %v320, %v341
    %v343 = vadd.f32 %v240, %v342
    %v344 = vtanh.pop %v343
    %v345 = vsub.f32 1.0, %v340
    %v346 = vmul.f32 %v345, %v344
    %v347 = vmul.f32 %v340, %v236
    %v348 = vadd.f32 %v346, %v347
    %s349 = scalar_lea.vmem [#allocation3], 48
    %v350 = vld [vmem:[%s349] sm:$0xff]
    %v351 = vld [vmem:[%s349 + $0x8] sm:$0xff]
    %v352 = vld [vmem:[%s349 + $0x10] sm:$0xff]
    %353 = vmatpush.msra.mxu0 %v118
    %354 = vmatpush.msra.mxu0 %v115
    %355 = vmatpush.msra.mxu0 %v112
    %356 = vmatpush.msra.mxu0 %v109
    %357 = vmatpush.msra.mxu0 %v106
    %358 = vmatpush.msra.mxu0 %v103
    %359 = vmatpush.msra.mxu0 %v100
    %360 = vmatpush.msra.mxu0 %v97
    %361 = vmatpush.msra.mxu0 %v94
    %362 = vmatpush.msra.mxu0 %v91
    %363 = vmatpush.msra.mxu0 %v88
    %364 = vmatpush.msra.mxu0 %v85
    %365 = vmatpush.msra.mxu0 %v82
    %366 = vmatpush.msra.mxu0 %v79
    %367 = vmatpush.msra.mxu0 %v76
    %368 = vmatpush.msra.mxu0 %v73
    %369 = vmatmul.f32.gmra.mxu0 %v348
    %v370 = vpop.f32.mrf.mxu0
    %v371 = vadd.f32 0.0, %v370
    %372 = vdwg.mxu0
    %373 = vmatpush.msra.mxu0 %v119
    %374 = vmatpush.msra.mxu0 %v116
    %375 = vmatpush.msra.mxu0 %v113
    %376 = vmatpush.msra.mxu0 %v110
    %377 = vmatpush.msra.mxu0 %v107
    %378 = vmatpush.msra.mxu0 %v104
    %379 = vmatpush.msra.mxu0 %v101
    %380 = vmatpush.msra.mxu0 %v98
    %381 = vmatpush.msra.mxu0 %v95
    %382 = vmatpush.msra.mxu0 %v92
    %383 = vmatpush.msra.mxu0 %v89
    %384 = vmatpush.msra.mxu0 %v86
    %385 = vmatpush.msra.mxu0 %v83
    %386 = vmatpush.msra.mxu0 %v80
    %387 = vmatpush.msra.mxu0 %v77
    %388 = vmatpush.msra.mxu0 %v74
    %389 = vmatmul.f32.gmra.mxu0 %v348
    %v390 = vpop.f32.mrf.mxu0
    %v391 = vadd.f32 0.0, %v390
    %392 = vdwg.mxu0
    %393 = vmatpush.msra.mxu0 %v120
    %394 = vmatpush.msra.mxu0 %v117
    %395 = vmatpush.msra.mxu0 %v114
    %396 = vmatpush.msra.mxu0 %v111
    %397 = vmatpush.msra.mxu0 %v108
    %398 = vmatpush.msra.mxu0 %v105
    %399 = vmatpush.msra.mxu0 %v102
    %400 = vmatpush.msra.mxu0 %v99
    %401 = vmatpush.msra.mxu0 %v96
    %402 = vmatpush.msra.mxu0 %v93
    %403 = vmatpush.msra.mxu0 %v90
    %404 = vmatpush.msra.mxu0 %v87
    %405 = vmatpush.msra.mxu0 %v84
    %406 = vmatpush.msra.mxu0 %v81
    %407 = vmatpush.msra.mxu0 %v78
    %408 = vmatpush.msra.mxu0 %v75
    %409 = vmatmul.f32.gmra.mxu0 %v348
    %v410 = vpop.f32.mrf.mxu0
    %v411 = vadd.f32 0.0, %v410
    %412 = vdwg.mxu0
    %v413 = vadd.f32 %v350, %v371
    %v414 = vxor.u32 %v413, 2147483648
    %v415 = vmul.f32 %v414, 1.442695
    %v416 = vpow.pop %v415
    %v417 = vadd.f32 %v416, 1.0
    %v418 = vrcp.pop %v417
    %v419 = vmul.f32 %v417, %v418
    %v420 = vsub.f32 1.0, %v419
    %v421 = vmul.f32 %v418, %v420
    %v422 = vadd.f32 %v418, %v421
    %vm423 = vweird.f32 %v417
    %vm424 = vweird.f32 %v418
    %vm425 = vmor %vm423, %vm424
    %v426 = vsel %vm425, %v418, %v422
    %v427 = vand.u32 2147483647, %v417
    %vm428 = vcmp.eq.f32.partialorder %v427, 8.507059e+37
    %v429 = vand.u32 %v417, 2147483648
    %v430 = vor.u32 1.1754944e-38, %v429
    %v431 = vsel %vm428, %v430, %v426
    %v432 = vmul.f32 1.0, %v431
    %v433 = vadd.f32 %v351, %v391
    %v434 = vxor.u32 %v433, 2147483648
    %v435 = vmul.f32 %v434, 1.442695
    %v436 = vpow.pop %v435
    %v437 = vadd.f32 %v436, 1.0
    %v438 = vrcp.pop %v437
    %v439 = vmul.f32 %v437, %v438
    %v440 = vsub.f32 1.0, %v439
    %v441 = vmul.f32 %v438, %v440
    %v442 = vadd.f32 %v438, %v441
    %vm443 = vweird.f32 %v437
    %vm444 = vweird.f32 %v438
    %vm445 = vmor %vm443, %vm444
    %v446 = vsel %vm445, %v438, %v442
    %v447 = vand.u32 2147483647, %v437
    %vm448 = vcmp.eq.f32.partialorder %v447, 8.507059e+37
    %v449 = vand.u32 %v437, 2147483648
    %v450 = vor.u32 1.1754944e-38, %v449
    %v451 = vsel %vm448, %v450, %v446
    %v452 = vmul.f32 1.0, %v451
    %v453 = vadd.f32 %v411, %v123
    %v454 = vmul.f32 %v432, %v453
    %v455 = vadd.f32 %v352, %v454
    %v456 = vtanh.pop %v455
    %v457 = vsub.f32 1.0, %v452
    %v458 = vmul.f32 %v457, %v456
    %v459 = vmul.f32 %v452, %v348
    %v460 = vadd.f32 %v458, %v459
    %s461 = scalar_lea.vmem [#allocation3], 72
    %v462 = vld [vmem:[%s461] sm:$0xff]
    %v463 = vld [vmem:[%s461 + $0x8] sm:$0xff]
    %v464 = vld [vmem:[%s461 + $0x10] sm:$0xff]
    %465 = vmatpush.msra.mxu0 %v118
    %466 = vmatpush.msra.mxu0 %v115
    %467 = vmatpush.msra.mxu0 %v112
    %468 = vmatpush.msra.mxu0 %v109
    %469 = vmatpush.msra.mxu0 %v106
    %470 = vmatpush.msra.mxu0 %v103
    %471 = vmatpush.msra.mxu0 %v100
    %472 = vmatpush.msra.mxu0 %v97
    %473 = vmatpush.msra.mxu0 %v94
    %474 = vmatpush.msra.mxu0 %v91
    %475 = vmatpush.msra.mxu0 %v88
    %476 = vmatpush.msra.mxu0 %v85
    %477 = vmatpush.msra.mxu0 %v82
    %478 = vmatpush.msra.mxu0 %v79
    %479 = vmatpush.msra.mxu0 %v76
    %480 = vmatpush.msra.mxu0 %v73
    %481 = vmatmul.f32.gmra.mxu0 %v460
    %v482 = vpop.f32.mrf.mxu0
    %v483 = vadd.f32 0.0, %v482
    %484 = vdwg.mxu0
    %485 = vmatpush.msra.mxu0 %v119
    %486 = vmatpush.msra.mxu0 %v116
    %487 = vmatpush.msra.mxu0 %v113
    %488 = vmatpush.msra.mxu0 %v110
    %489 = vmatpush.msra.mxu0 %v107
    %490 = vmatpush.msra.mxu0 %v104
    %491 = vmatpush.msra.mxu0 %v101
    %492 = vmatpush.msra.mxu0 %v98
    %493 = vmatpush.msra.mxu0 %v95
    %494 = vmatpush.msra.mxu0 %v92
    %495 = vmatpush.msra.mxu0 %v89
    %496 = vmatpush.msra.mxu0 %v86
    %497 = vmatpush.msra.mxu0 %v83
    %498 = vmatpush.msra.mxu0 %v80
    %499 = vmatpush.msra.mxu0 %v77
    %500 = vmatpush.msra.mxu0 %v74
    %501 = vmatmul.f32.gmra.mxu0 %v460
    %v502 = vpop.f32.mrf.mxu0
    %v503 = vadd.f32 0.0, %v502
    %504 = vdwg.mxu0
    %505 = vmatpush.msra.mxu0 %v120
    %506 = vmatpush.msra.mxu0 %v117
    %507 = vmatpush.msra.mxu0 %v114
    %508 = vmatpush.msra.mxu0 %v111
    %509 = vmatpush.msra.mxu0 %v108
    %510 = vmatpush.msra.mxu0 %v105
    %511 = vmatpush.msra.mxu0 %v102
    %512 = vmatpush.msra.mxu0 %v99
    %513 = vmatpush.msra.mxu0 %v96
    %514 = vmatpush.msra.mxu0 %v93
    %515 = vmatpush.msra.mxu0 %v90
    %516 = vmatpush.msra.mxu0 %v87
    %517 = vmatpush.msra.mxu0 %v84
    %518 = vmatpush.msra.mxu0 %v81
    %519 = vmatpush.msra.mxu0 %v78
    %520 = vmatpush.msra.mxu0 %v75
    %521 = vmatmul.f32.gmra.mxu0 %v460
    %v522 = vpop.f32.mrf.mxu0
    %v523 = vadd.f32 0.0, %v522
    %524 = vdwg.mxu0
    %v525 = vadd.f32 %v462, %v483
    %v526 = vxor.u32 %v525, 2147483648
    %v527 = vmul.f32 %v526, 1.442695
    %v528 = vpow.pop %v527
    %v529 = vadd.f32 %v528, 1.0
    %v530 = vrcp.pop %v529
    %v531 = vmul.f32 %v529, %v530
    %v532 = vsub.f32 1.0, %v531
    %v533 = vmul.f32 %v530, %v532
    %v534 = vadd.f32 %v530, %v533
    %vm535 = vweird.f32 %v529
    %vm536 = vweird.f32 %v530
    %vm537 = vmor %vm535, %vm536
    %v538 = vsel %vm537, %v530, %v534
    %v539 = vand.u32 2147483647, %v529
    %vm540 = vcmp.eq.f32.partialorder %v539, 8.507059e+37
    %v541 = vand.u32 %v529, 2147483648
    %v542 = vor.u32 1.1754944e-38, %v541
    %v543 = vsel %vm540, %v542, %v538
    %v544 = vmul.f32 1.0, %v543
    %v545 = vadd.f32 %v463, %v503
    %v546 = vxor.u32 %v545, 2147483648
    %v547 = vmul.f32 %v546, 1.442695
    %v548 = vpow.pop %v547
    %v549 = vadd.f32 %v548, 1.0
    %v550 = vrcp.pop %v549
    %v551 = vmul.f32 %v549, %v550
    %v552 = vsub.f32 1.0, %v551
    %v553 = vmul.f32 %v550, %v552
    %v554 = vadd.f32 %v550, %v553
    %vm555 = vweird.f32 %v549
    %vm556 = vweird.f32 %v550
    %vm557 = vmor %vm555, %vm556
    %v558 = vsel %vm557, %v550, %v554
    %v559 = vand.u32 2147483647, %v549
    %vm560 = vcmp.eq.f32.partialorder %v559, 8.507059e+37
    %v561 = vand.u32 %v549, 2147483648
    %v562 = vor.u32 1.1754944e-38, %v561
    %v563 = vsel %vm560, %v562, %v558
    %v564 = vmul.f32 1.0, %v563
    %v565 = vadd.f32 %v523, %v123
    %v566 = vmul.f32 %v544, %v565
    %v567 = vadd.f32 %v464, %v566
    %v568 = vtanh.pop %v567
    %v569 = vsub.f32 1.0, %v564
    %v570 = vmul.f32 %v569, %v568
    %v571 = vmul.f32 %v564, %v460
    %v572 = vadd.f32 %v570, %v571
    %s573 = scalar_lea.vmem [#allocation3], 96
    %v574 = vld [vmem:[%s573] sm:$0xff]
    %v575 = vld [vmem:[%s573 + $0x8] sm:$0xff]
    %v576 = vld [vmem:[%s573 + $0x10] sm:$0xff]
    %577 = vmatpush.msra.mxu0 %v118
    %578 = vmatpush.msra.mxu0 %v115
    %579 = vmatpush.msra.mxu0 %v112
    %580 = vmatpush.msra.mxu0 %v109
    %581 = vmatpush.msra.mxu0 %v106
    %582 = vmatpush.msra.mxu0 %v103
    %583 = vmatpush.msra.mxu0 %v100
    %584 = vmatpush.msra.mxu0 %v97
    %585 = vmatpush.msra.mxu0 %v94
    %586 = vmatpush.msra.mxu0 %v91
    %587 = vmatpush.msra.mxu0 %v88
    %588 = vmatpush.msra.mxu0 %v85
    %589 = vmatpush.msra.mxu0 %v82
    %590 = vmatpush.msra.mxu0 %v79
    %591 = vmatpush.msra.mxu0 %v76
    %592 = vmatpush.msra.mxu0 %v73
    %593 = vmatmul.f32.gmra.mxu0 %v572
    %v594 = vpop.f32.mrf.mxu0
    %v595 = vadd.f32 0.0, %v594
    %596 = vdwg.mxu0
    %597 = vmatpush.msra.mxu0 %v119
    %598 = vmatpush.msra.mxu0 %v116
    %599 = vmatpush.msra.mxu0 %v113
    %600 = vmatpush.msra.mxu0 %v110
    %601 = vmatpush.msra.mxu0 %v107
    %602 = vmatpush.msra.mxu0 %v104
    %603 = vmatpush.msra.mxu0 %v101
    %604 = vmatpush.msra.mxu0 %v98
    %605 = vmatpush.msra.mxu0 %v95
    %606 = vmatpush.msra.mxu0 %v92
    %607 = vmatpush.msra.mxu0 %v89
    %608 = vmatpush.msra.mxu0 %v86
    %609 = vmatpush.msra.mxu0 %v83
    %610 = vmatpush.msra.mxu0 %v80
    %611 = vmatpush.msra.mxu0 %v77
    %612 = vmatpush.msra.mxu0 %v74
    %613 = vmatmul.f32.gmra.mxu0 %v572
    %v614 = vpop.f32.mrf.mxu0
    %v615 = vadd.f32 0.0, %v614
    %616 = vdwg.mxu0
    %617 = vmatpush.msra.mxu0 %v120
    %618 = vmatpush.msra.mxu0 %v117
    %619 = vmatpush.msra.mxu0 %v114
    %620 = vmatpush.msra.mxu0 %v111
    %621 = vmatpush.msra.mxu0 %v108
    %622 = vmatpush.msra.mxu0 %v105
    %623 = vmatpush.msra.mxu0 %v102
    %624 = vmatpush.msra.mxu0 %v99
    %625 = vmatpush.msra.mxu0 %v96
    %626 = vmatpush.msra.mxu0 %v93
    %627 = vmatpush.msra.mxu0 %v90
    %628 = vmatpush.msra.mxu0 %v87
    %629 = vmatpush.msra.mxu0 %v84
    %630 = vmatpush.msra.mxu0 %v81
    %631 = vmatpush.msra.mxu0 %v78
    %632 = vmatpush.msra.mxu0 %v75
    %633 = vmatmul.f32.gmra.mxu0 %v572
    %v634 = vpop.f32.mrf.mxu0
    %v635 = vadd.f32 0.0, %v634
    %636 = vdwg.mxu0
    %v637 = vadd.f32 %v574, %v595
    %v638 = vxor.u32 %v637, 2147483648
    %v639 = vmul.f32 %v638, 1.442695
    %v640 = vpow.pop %v639
    %v641 = vadd.f32 %v640, 1.0
    %v642 = vrcp.pop %v641
    %v643 = vmul.f32 %v641, %v642
    %v644 = vsub.f32 1.0, %v643
    %v645 = vmul.f32 %v642, %v644
    %v646 = vadd.f32 %v642, %v645
    %vm647 = vweird.f32 %v641
    %vm648 = vweird.f32 %v642
    %vm649 = vmor %vm647, %vm648
    %v650 = vsel %vm649, %v642, %v646
    %v651 = vand.u32 2147483647, %v641
    %vm652 = vcmp.eq.f32.partialorder %v651, 8.507059e+37
    %v653 = vand.u32 %v641, 2147483648
    %v654 = vor.u32 1.1754944e-38, %v653
    %v655 = vsel %vm652, %v654, %v650
    %v656 = vmul.f32 1.0, %v655
    %v657 = vadd.f32 %v575, %v615
    %v658 = vxor.u32 %v657, 2147483648
    %v659 = vmul.f32 %v658, 1.442695
    %v660 = vpow.pop %v659
    %v661 = vadd.f32 %v660, 1.0
    %v662 = vrcp.pop %v661
    %v663 = vmul.f32 %v661, %v662
    %v664 = vsub.f32 1.0, %v663
    %v665 = vmul.f32 %v662, %v664
    %v666 = vadd.f32 %v662, %v665
    %vm667 = vweird.f32 %v661
    %vm668 = vweird.f32 %v662
    %vm669 = vmor %vm667, %vm668
    %v670 = vsel %vm669, %v662, %v666
    %v671 = vand.u32 2147483647, %v661
    %vm672 = vcmp.eq.f32.partialorder %v671, 8.507059e+37
    %v673 = vand.u32 %v661, 2147483648
    %v674 = vor.u32 1.1754944e-38, %v673
    %v675 = vsel %vm672, %v674, %v670
    %v676 = vmul.f32 1.0, %v675
    %v677 = vadd.f32 %v635, %v123
    %v678 = vmul.f32 %v656, %v677
    %v679 = vadd.f32 %v576, %v678
    %v680 = vtanh.pop %v679
    %v681 = vsub.f32 1.0, %v676
    %v682 = vmul.f32 %v681, %v680
    %v683 = vmul.f32 %v676, %v572
    %v684 = vadd.f32 %v682, %v683
    %s685 = scalar_lea.vmem [#allocation3], 120
    %v686 = vld [vmem:[%s685] sm:$0xff]
    %v687 = vld [vmem:[%s685 + $0x8] sm:$0xff]
    %v688 = vld [vmem:[%s685 + $0x10] sm:$0xff]
    %689 = vmatpush.msra.mxu0 %v118
    %690 = vmatpush.msra.mxu0 %v115
    %691 = vmatpush.msra.mxu0 %v112
    %692 = vmatpush.msra.mxu0 %v109
    %693 = vmatpush.msra.mxu0 %v106
    %694 = vmatpush.msra.mxu0 %v103
    %695 = vmatpush.msra.mxu0 %v100
    %696 = vmatpush.msra.mxu0 %v97
    %697 = vmatpush.msra.mxu0 %v94
    %698 = vmatpush.msra.mxu0 %v91
    %699 = vmatpush.msra.mxu0 %v88
    %700 = vmatpush.msra.mxu0 %v85
    %701 = vmatpush.msra.mxu0 %v82
    %702 = vmatpush.msra.mxu0 %v79
    %703 = vmatpush.msra.mxu0 %v76
    %704 = vmatpush.msra.mxu0 %v73
    %705 = vmatmul.f32.gmra.mxu0 %v684
    %v706 = vpop.f32.mrf.mxu0
    %v707 = vadd.f32 0.0, %v706
    %708 = vdwg.mxu0
    %709 = vmatpush.msra.mxu0 %v119
    %710 = vmatpush.msra.mxu0 %v116
    %711 = vmatpush.msra.mxu0 %v113
    %712 = vmatpush.msra.mxu0 %v110
    %713 = vmatpush.msra.mxu0 %v107
    %714 = vmatpush.msra.mxu0 %v104
    %715 = vmatpush.msra.mxu0 %v101
    %716 = vmatpush.msra.mxu0 %v98
    %717 = vmatpush.msra.mxu0 %v95
    %718 = vmatpush.msra.mxu0 %v92
    %719 = vmatpush.msra.mxu0 %v89
    %720 = vmatpush.msra.mxu0 %v86
    %721 = vmatpush.msra.mxu0 %v83
    %722 = vmatpush.msra.mxu0 %v80
    %723 = vmatpush.msra.mxu0 %v77
    %724 = vmatpush.msra.mxu0 %v74
    %725 = vmatmul.f32.gmra.mxu0 %v684
    %v726 = vpop.f32.mrf.mxu0
    %v727 = vadd.f32 0.0, %v726
    %728 = vdwg.mxu0
    %729 = vmatpush.msra.mxu0 %v120
    %730 = vmatpush.msra.mxu0 %v117
    %731 = vmatpush.msra.mxu0 %v114
    %732 = vmatpush.msra.mxu0 %v111
    %733 = vmatpush.msra.mxu0 %v108
    %734 = vmatpush.msra.mxu0 %v105
    %735 = vmatpush.msra.mxu0 %v102
    %736 = vmatpush.msra.mxu0 %v99
    %737 = vmatpush.msra.mxu0 %v96
    %738 = vmatpush.msra.mxu0 %v93
    %739 = vmatpush.msra.mxu0 %v90
    %740 = vmatpush.msra.mxu0 %v87
    %741 = vmatpush.msra.mxu0 %v84
    %742 = vmatpush.msra.mxu0 %v81
    %743 = vmatpush.msra.mxu0 %v78
    %744 = vmatpush.msra.mxu0 %v75
    %745 = vmatmul.f32.gmra.mxu0 %v684
    %v746 = vpop.f32.mrf.mxu0
    %v747 = vadd.f32 0.0, %v746
    %748 = vdwg.mxu0
    %v749 = vadd.f32 %v686, %v707
    %v750 = vxor.u32 %v749, 2147483648
    %v751 = vmul.f32 %v750, 1.442695
    %v752 = vpow.pop %v751
    %v753 = vadd.f32 %v752, 1.0
    %v754 = vrcp.pop %v753
    %v755 = vmul.f32 %v753, %v754
    %v756 = vsub.f32 1.0, %v755
    %v757 = vmul.f32 %v754, %v756
    %v758 = vadd.f32 %v754, %v757
    %vm759 = vweird.f32 %v753
    %vm760 = vweird.f32 %v754
    %vm761 = vmor %vm759, %vm760
    %v762 = vsel %vm761, %v754, %v758
    %v763 = vand.u32 2147483647, %v753
    %vm764 = vcmp.eq.f32.partialorder %v763, 8.507059e+37
    %v765 = vand.u32 %v753, 2147483648
    %v766 = vor.u32 1.1754944e-38, %v765
    %v767 = vsel %vm764, %v766, %v762
    %v768 = vmul.f32 1.0, %v767
    %v769 = vadd.f32 %v687, %v727
    %v770 = vxor.u32 %v769, 2147483648
    %v771 = vmul.f32 %v770, 1.442695
    %v772 = vpow.pop %v771
    %v773 = vadd.f32 %v772, 1.0
    %v774 = vrcp.pop %v773
    %v775 = vmul.f32 %v773, %v774
    %v776 = vsub.f32 1.0, %v775
    %v777 = vmul.f32 %v774, %v776
    %v778 = vadd.f32 %v774, %v777
    %vm779 = vweird.f32 %v773
    %vm780 = vweird.f32 %v774
    %vm781 = vmor %vm779, %vm780
    %v782 = vsel %vm781, %v774, %v778
    %v783 = vand.u32 2147483647, %v773
    %vm784 = vcmp.eq.f32.partialorder %v783, 8.507059e+37
    %v785 = vand.u32 %v773, 2147483648
    %v786 = vor.u32 1.1754944e-38, %v785
    %v787 = vsel %vm784, %v786, %v782
    %v788 = vmul.f32 1.0, %v787
    %v789 = vadd.f32 %v747, %v123
    %v790 = vmul.f32 %v768, %v789
    %v791 = vadd.f32 %v688, %v790
    %v792 = vtanh.pop %v791
    %v793 = vsub.f32 1.0, %v788
    %v794 = vmul.f32 %v793, %v792
    %v795 = vmul.f32 %v788, %v684
    %v796 = vadd.f32 %v794, %v795
    %s797 = scalar_lea.vmem [#allocation3], 144
    %v798 = vld [vmem:[%s797] sm:$0xff]
    %v799 = vld [vmem:[%s797 + $0x8] sm:$0xff]
    %v800 = vld [vmem:[%s797 + $0x10] sm:$0xff]
    %801 = vmatpush.msra.mxu0 %v118
    %802 = vmatpush.msra.mxu0 %v115
    %803 = vmatpush.msra.mxu0 %v112
    %804 = vmatpush.msra.mxu0 %v109
    %805 = vmatpush.msra.mxu0 %v106
    %806 = vmatpush.msra.mxu0 %v103
    %807 = vmatpush.msra.mxu0 %v100
    %808 = vmatpush.msra.mxu0 %v97
    %809 = vmatpush.msra.mxu0 %v94
    %810 = vmatpush.msra.mxu0 %v91
    %811 = vmatpush.msra.mxu0 %v88
    %812 = vmatpush.msra.mxu0 %v85
    %813 = vmatpush.msra.mxu0 %v82
    %814 = vmatpush.msra.mxu0 %v79
    %815 = vmatpush.msra.mxu0 %v76
    %816 = vmatpush.msra.mxu0 %v73
    %817 = vmatmul.f32.gmra.mxu0 %v796
    %v818 = vpop.f32.mrf.mxu0
    %v819 = vadd.f32 0.0, %v818
    %820 = vdwg.mxu0
    %821 = vmatpush.msra.mxu0 %v119
    %822 = vmatpush.msra.mxu0 %v116
    %823 = vmatpush.msra.mxu0 %v113
    %824 = vmatpush.msra.mxu0 %v110
    %825 = vmatpush.msra.mxu0 %v107
    %826 = vmatpush.msra.mxu0 %v104
    %827 = vmatpush.msra.mxu0 %v101
    %828 = vmatpush.msra.mxu0 %v98
    %829 = vmatpush.msra.mxu0 %v95
    %830 = vmatpush.msra.mxu0 %v92
    %831 = vmatpush.msra.mxu0 %v89
    %832 = vmatpush.msra.mxu0 %v86
    %833 = vmatpush.msra.mxu0 %v83
    %834 = vmatpush.msra.mxu0 %v80
    %835 = vmatpush.msra.mxu0 %v77
    %836 = vmatpush.msra.mxu0 %v74
    %837 = vmatmul.f32.gmra.mxu0 %v796
    %v838 = vpop.f32.mrf.mxu0
    %v839 = vadd.f32 0.0, %v838
    %840 = vdwg.mxu0
    %841 = vmatpush.msra.mxu0 %v120
    %842 = vmatpush.msra.mxu0 %v117
    %843 = vmatpush.msra.mxu0 %v114
    %844 = vmatpush.msra.mxu0 %v111
    %845 = vmatpush.msra.mxu0 %v108
    %846 = vmatpush.msra.mxu0 %v105
    %847 = vmatpush.msra.mxu0 %v102
    %848 = vmatpush.msra.mxu0 %v99
    %849 = vmatpush.msra.mxu0 %v96
    %850 = vmatpush.msra.mxu0 %v93
    %851 = vmatpush.msra.mxu0 %v90
    %852 = vmatpush.msra.mxu0 %v87
    %853 = vmatpush.msra.mxu0 %v84
    %854 = vmatpush.msra.mxu0 %v81
    %855 = vmatpush.msra.mxu0 %v78
    %856 = vmatpush.msra.mxu0 %v75
    %857 = vmatmul.f32.gmra.mxu0 %v796
    %v858 = vpop.f32.mrf.mxu0
    %v859 = vadd.f32 0.0, %v858
    %860 = vdwg.mxu0
    %v861 = vadd.f32 %v798, %v819
    %v862 = vxor.u32 %v861, 2147483648
    %v863 = vmul.f32 %v862, 1.442695
    %v864 = vpow.pop %v863
    %v865 = vadd.f32 %v864, 1.0
    %v866 = vrcp.pop %v865
    %v867 = vmul.f32 %v865, %v866
    %v868 = vsub.f32 1.0, %v867
    %v869 = vmul.f32 %v866, %v868
    %v870 = vadd.f32 %v866, %v869
    %vm871 = vweird.f32 %v865
    %vm872 = vweird.f32 %v866
    %vm873 = vmor %vm871, %vm872
    %v874 = vsel %vm873, %v866, %v870
    %v875 = vand.u32 2147483647, %v865
    %vm876 = vcmp.eq.f32.partialorder %v875, 8.507059e+37
    %v877 = vand.u32 %v865, 2147483648
    %v878 = vor.u32 1.1754944e-38, %v877
    %v879 = vsel %vm876, %v878, %v874
    %v880 = vmul.f32 1.0, %v879
    %v881 = vadd.f32 %v799, %v839
    %v882 = vxor.u32 %v881, 2147483648
    %v883 = vmul.f32 %v882, 1.442695
    %v884 = vpow.pop %v883
    %v885 = vadd.f32 %v884, 1.0
    %v886 = vrcp.pop %v885
    %v887 = vmul.f32 %v885, %v886
    %v888 = vsub.f32 1.0, %v887
    %v889 = vmul.f32 %v886, %v888
    %v890 = vadd.f32 %v886, %v889
    %vm891 = vweird.f32 %v885
    %vm892 = vweird.f32 %v886
    %vm893 = vmor %vm891, %vm892
    %v894 = vsel %vm893, %v886, %v890
    %v895 = vand.u32 2147483647, %v885
    %vm896 = vcmp.eq.f32.partialorder %v895, 8.507059e+37
    %v897 = vand.u32 %v885, 2147483648
    %v898 = vor.u32 1.1754944e-38, %v897
    %v899 = vsel %vm896, %v898, %v894
    %v900 = vmul.f32 1.0, %v899
    %v901 = vadd.f32 %v859, %v123
    %v902 = vmul.f32 %v880, %v901
    %v903 = vadd.f32 %v800, %v902
    %v904 = vtanh.pop %v903
    %v905 = vsub.f32 1.0, %v900
    %v906 = vmul.f32 %v905, %v904
    %v907 = vmul.f32 %v900, %v796
    %v908 = vadd.f32 %v906, %v907
    %s909 = scalar_lea.vmem [#allocation3], 168
    %v910 = vld [vmem:[%s909] sm:$0xff]
    %v911 = vld [vmem:[%s909 + $0x8] sm:$0xff]
    %v912 = vld [vmem:[%s909 + $0x10] sm:$0xff]
    %913 = vmatpush.msra.mxu0 %v118
    %914 = vmatpush.msra.mxu0 %v115
    %915 = vmatpush.msra.mxu0 %v112
    %916 = vmatpush.msra.mxu0 %v109
    %917 = vmatpush.msra.mxu0 %v106
    %918 = vmatpush.msra.mxu0 %v103
    %919 = vmatpush.msra.mxu0 %v100
    %920 = vmatpush.msra.mxu0 %v97
    %921 = vmatpush.msra.mxu0 %v94
    %922 = vmatpush.msra.mxu0 %v91
    %923 = vmatpush.msra.mxu0 %v88
    %924 = vmatpush.msra.mxu0 %v85
    %925 = vmatpush.msra.mxu0 %v82
    %926 = vmatpush.msra.mxu0 %v79
    %927 = vmatpush.msra.mxu0 %v76
    %928 = vmatpush.msra.mxu0 %v73
    %929 = vmatmul.f32.gmra.mxu0 %v908
    %v930 = vpop.f32.mrf.mxu0
    %v931 = vadd.f32 0.0, %v930
    %932 = vdwg.mxu0
    %933 = vmatpush.msra.mxu0 %v119
    %934 = vmatpush.msra.mxu0 %v116
    %935 = vmatpush.msra.mxu0 %v113
    %936 = vmatpush.msra.mxu0 %v110
    %937 = vmatpush.msra.mxu0 %v107
    %938 = vmatpush.msra.mxu0 %v104
    %939 = vmatpush.msra.mxu0 %v101
    %940 = vmatpush.msra.mxu0 %v98
    %941 = vmatpush.msra.mxu0 %v95
    %942 = vmatpush.msra.mxu0 %v92
    %943 = vmatpush.msra.mxu0 %v89
    %944 = vmatpush.msra.mxu0 %v86
    %945 = vmatpush.msra.mxu0 %v83
    %946 = vmatpush.msra.mxu0 %v80
    %947 = vmatpush.msra.mxu0 %v77
    %948 = vmatpush.msra.mxu0 %v74
    %949 = vmatmul.f32.gmra.mxu0 %v908
    %v950 = vpop.f32.mrf.mxu0
    %v951 = vadd.f32 0.0, %v950
    %952 = vdwg.mxu0
    %953 = vmatpush.msra.mxu0 %v120
    %954 = vmatpush.msra.mxu0 %v117
    %955 = vmatpush.msra.mxu0 %v114
    %956 = vmatpush.msra.mxu0 %v111
    %957 = vmatpush.msra.mxu0 %v108
    %958 = vmatpush.msra.mxu0 %v105
    %959 = vmatpush.msra.mxu0 %v102
    %960 = vmatpush.msra.mxu0 %v99
    %961 = vmatpush.msra.mxu0 %v96
    %962 = vmatpush.msra.mxu0 %v93
    %963 = vmatpush.msra.mxu0 %v90
    %964 = vmatpush.msra.mxu0 %v87
    %965 = vmatpush.msra.mxu0 %v84
    %966 = vmatpush.msra.mxu0 %v81
    %967 = vmatpush.msra.mxu0 %v78
    %968 = vmatpush.msra.mxu0 %v75
    %969 = vmatmul.f32.gmra.mxu0 %v908
    %v970 = vpop.f32.mrf.mxu0
    %v971 = vadd.f32 0.0, %v970
    %972 = vdwg.mxu0
    %v973 = vadd.f32 %v910, %v931
    %v974 = vxor.u32 %v973, 2147483648
    %v975 = vmul.f32 %v974, 1.442695
    %v976 = vpow.pop %v975
    %v977 = vadd.f32 %v976, 1.0
    %v978 = vrcp.pop %v977
    %v979 = vmul.f32 %v977, %v978
    %v980 = vsub.f32 1.0, %v979
    %v981 = vmul.f32 %v978, %v980
    %v982 = vadd.f32 %v978, %v981
    %vm983 = vweird.f32 %v977
    %vm984 = vweird.f32 %v978
    %vm985 = vmor %vm983, %vm984
    %v986 = vsel %vm985, %v978, %v982
    %v987 = vand.u32 2147483647, %v977
    %vm988 = vcmp.eq.f32.partialorder %v987, 8.507059e+37
    %v989 = vand.u32 %v977, 2147483648
    %v990 = vor.u32 1.1754944e-38, %v989
    %v991 = vsel %vm988, %v990, %v986
    %v992 = vmul.f32 1.0, %v991
    %v993 = vadd.f32 %v911, %v951
    %v994 = vxor.u32 %v993, 2147483648
    %v995 = vmul.f32 %v994, 1.442695
    %v996 = vpow.pop %v995
    %v997 = vadd.f32 %v996, 1.0
    %v998 = vrcp.pop %v997
    %v999 = vmul.f32 %v997, %v998
    %v1000 = vsub.f32 1.0, %v999
    %v1001 = vmul.f32 %v998, %v1000
    %v1002 = vadd.f32 %v998, %v1001
    %vm1003 = vweird.f32 %v997
    %vm1004 = vweird.f32 %v998
    %vm1005 = vmor %vm1003, %vm1004
    %v1006 = vsel %vm1005, %v998, %v1002
    %v1007 = vand.u32 2147483647, %v997
    %vm1008 = vcmp.eq.f32.partialorder %v1007, 8.507059e+37
    %v1009 = vand.u32 %v997, 2147483648
    %v1010 = vor.u32 1.1754944e-38, %v1009
    %v1011 = vsel %vm1008, %v1010, %v1006
    %v1012 = vmul.f32 1.0, %v1011
    %v1013 = vadd.f32 %v971, %v123
    %v1014 = vmul.f32 %v992, %v1013
    %v1015 = vadd.f32 %v912, %v1014
    %v1016 = vtanh.pop %v1015
    %v1017 = vsub.f32 1.0, %v1012
    %v1018 = vmul.f32 %v1017, %v1016
    %v1019 = vmul.f32 %v1012, %v908
    %v1020 = vadd.f32 %v1018, %v1019
    %1021 = vst [vmem:[#allocation2] sm:$0xff] %v1020
    // Predicated region
    $region38: #{tpu_custom_call.1} parent=1 // pred_check
      %p1022 = pneg %p68
    $region39: #{tpu_custom_call.1} parent=1 // pred_check_branch
      %1024 = sbr.rel (%p1022) target = $region41
    $region40: #{tpu_custom_call.1} parent=1 // pred_region
      %v1025 = vld [vmem:[#allocation8] sm:$0xff]
      %v1026 = vld [vmem:[#allocation8 + $0x8] sm:$0xff]
      %v1027 = vld [vmem:[#allocation8 + $0x10] sm:$0xff]
      %v1028 = vld [vmem:[#allocation8 + $0x18] sm:$0xff]
      %v1029 = vld [vmem:[#allocation8 + $0x20] sm:$0xff]
      %v1030 = vld [vmem:[#allocation8 + $0x28] sm:$0xff]
      %v1031 = vld [vmem:[#allocation8 + $0x30] sm:$0xff]
      %v1032 = vld [vmem:[#allocation8 + $0x38] sm:$0xff]
      %v1033 = vld [vmem:[#allocation8 + $0x40] sm:$0xff]
      %v1034 = vld [vmem:[#allocation8 + $0x48] sm:$0xff]
      %v1035 = vld [vmem:[#allocation8 + $0x50] sm:$0xff]
      %v1036 = vld [vmem:[#allocation8 + $0x58] sm:$0xff]
      %v1037 = vld [vmem:[#allocation8 + $0x60] sm:$0xff]
      %v1038 = vld [vmem:[#allocation8 + $0x68] sm:$0xff]
      %v1039 = vld [vmem:[#allocation8 + $0x70] sm:$0xff]
      %v1040 = vld [vmem:[#allocation8 + $0x78] sm:$0xff]
      %v1041 = vld [vmem:[%s4] sm:$0x1]
      %v1043 = vperm.slane %v1041, 0
      %1045 = vmatpush.msra.mxu0 %v1040
      %1046 = vmatpush.msra.mxu0 %v1039
      %1047 = vmatpush.msra.mxu0 %v1038
      %1048 = vmatpush.msra.mxu0 %v1037
      %1049 = vmatpush.msra.mxu0 %v1036
      %1050 = vmatpush.msra.mxu0 %v1035
      %1051 = vmatpush.msra.mxu0 %v1034
      %1052 = vmatpush.msra.mxu0 %v1033
      %1053 = vmatpush.msra.mxu0 %v1032
      %1054 = vmatpush.msra.mxu0 %v1031
      %1055 = vmatpush.msra.mxu0 %v1030
      %1056 = vmatpush.msra.mxu0 %v1029
      %1057 = vmatpush.msra.mxu0 %v1028
      %1058 = vmatpush.msra.mxu0 %v1027
      %1059 = vmatpush.msra.mxu0 %v1026
      %1060 = vmatpush.msra.mxu0 %v1025
      %1061 = vmatmul.f32.gmra.mxu0 %v1020
      %v1062 = vpop.f32.mrf.mxu0
      %v1063 = vadd.f32 %v1043, %v1062
      %1064 = vdwg.mxu0
      %vm1065 = vcmp.ge.f32.partialorder %v1063, 0.0
      %v1066 = vmul.f32 %v1063, 0.01
      %v1067 = vsel %vm1065, %v1063, %v1066
      %1068 = vst [vmem:[#allocation9] sm:$0xff] %v1067
    $region41: #{tpu_custom_call.1} parent=1 // pred_fallthru
      _
    // Predicated region
    $region42: #{tpu_custom_call.1} parent=1 // pred_check
      _
    $region43: #{tpu_custom_call.1} parent=1 // pred_check_branch
      %1070 = sbr.rel (0) target = $region45
    $region44: #{tpu_custom_call.1} parent=1 // pred_region
      %1072 = vsyncadd [#allocation5], 0
      %s1074 = sshll.u32 [#allocation9], 4
      %s1075 = int_to_ptr.vmem [resolvable:$true] %s1074
      %s1076 = sshll.u32 %s5, 4
      %s1077 = int_to_ptr.hbm [resolvable:$true] %s1076
      %1079 = dma.vmem_to_hbm [thread:$0]  %s1075, 128, %s1077, [#allocation5]
    $region45: #{tpu_custom_call.1} parent=1 // pred_fallthru
      _
    // Predicated region
    $region46: #{tpu_custom_call.1} parent=1 // pred_check
      _
    $region47: #{tpu_custom_call.1} parent=1 // pred_check_branch
      %1081 = sbr.rel (0) target = $region49
    $region48: #{tpu_custom_call.1} parent=1 // pred_region
      %1083 = dma.done [#allocation5], 128
    $region49: #{tpu_custom_call.1} parent=1 // pred_fallthru
      _
    %1084 = vsyncpa [#allocation4], 1
    %1085 = vsyncpa [#allocation7], 1
    %1086 = vsyncpa [#allocation5], 1

</llo_original>
